<compile_context>
chip_gen: v5e
topology: v5e:2x2
jax: 0.10.0
libtpu: 0.0.40
codegen_flags: <defaults>
</compile_context>

<pallas_src>
import functools

import jax
import jax.numpy as jnp
from jax.experimental import pallas as pl
from jax.experimental.pallas import tpu as pltpu

C_IN = 4
HID = 32
NUM_CLASSES = 8
KSIZE = 3


def classifier_kernel(rows_ref, w_conv_ref, b_conv_ref, w_head_ref, b_head_ref,
                      logits_ref, emb_ref, *, tile_h, width, cin, hw):
    """Fused conv3x3 (+bias, ReLU) + global-avg-pool accumulate + linear head."""
    j = pl.program_id(1)

    # Zero the resident pooled-embedding accumulator at the first row-tile.
    @pl.when(j == 0)
    def _init():
        emb_ref[...] = jnp.zeros_like(emb_ref)

    # In-VMEM im2col for the 3x3 'same' conv: the nine taps are shifted windows
    # of the halo'd row block already resident in VMEM; concatenate along
    # channels and do a single bf16 MXU matmul with K = 9*C, f32 accumulation.
    taps = [rows_ref[dy:dy + tile_h, dx:dx + width, :]          # [tile_h, W, C] bf16
            for dy in range(KSIZE) for dx in range(KSIZE)]
    patches = jnp.concatenate(taps, axis=-1)                    # [tile_h, W, 9C]
    patches = patches.reshape(tile_h * width, KSIZE * KSIZE * cin)
    conv = jnp.dot(patches, w_conv_ref[...],                    # [9C, HID] bf16
                   preferred_element_type=jnp.float32)
    conv = jnp.maximum(conv + b_conv_ref[...], 0.0)             # f32 [tile_h*W, HID]

    # Global average pool: running spatial sum; divide by H*W at finalize.
    emb_ref[...] += jnp.sum(conv, axis=0, keepdims=True)        # [1, HID]

    # Finalize once per batch block: mean + classification head (off hot loop).
    @pl.when(j == pl.num_programs(1) - 1)
    def _finalize():
        emb = emb_ref[...] * (1.0 / hw)
        emb_ref[...] = emb
        logits_ref[...] = (jnp.dot(emb, w_head_ref[...],
                                   preferred_element_type=jnp.float32)
                           + b_head_ref[...])                   # [1, NUM_CLASSES]


def _pick_tile_h(h, w):
    """Largest divisor of h whose halo'd bf16 block fits a per-buffer budget.

    Pallas double-buffers the input block; its VMEM footprint is lane/sublane
    padded: ~ (tile_h+2) * round_up(W+2, 16) * 128 lanes * 2 B.
    """
    budget = 2 << 20                       # 2 MiB per buffer (x2 for double buffer)
    sub = ((w + 2 + 15) // 16) * 16        # bf16 sublane padding of the W+2 axis
    for t in range(h, 0, -1):
        if h % t == 0 and (t + 2) * sub * 128 * 2 <= budget:
            return t
    return 1


def init_params(key):
    k1, k2, k3, k4 = jax.random.split(key, 4)
    # Conv weight in PyTorch layout [out, in, kh, kw].
    w_conv_pt = jax.random.normal(k1, (HID, C_IN, KSIZE, KSIZE), jnp.float32) * 0.1
    b_conv = jax.random.normal(k2, (HID,), jnp.float32) * 0.1
    w_head_pt = jax.random.normal(k3, (NUM_CLASSES, HID), jnp.float32) * 0.1
    b_head = jax.random.normal(k4, (NUM_CLASSES,), jnp.float32) * 0.1
    # Tap ordering (dy, dx, c): [out,in,kh,kw] -> [kh,kw,in,out] -> [9, C, out].
    w_conv = jnp.transpose(w_conv_pt, (2, 3, 1, 0)).reshape(KSIZE * KSIZE, C_IN, HID)
    return {
        "w_conv": w_conv,                               # f32 [9, C, HID]
        "b_conv": b_conv.reshape(1, HID),
        "w_head": jnp.transpose(w_head_pt, (1, 0)),     # [HID, NUM_CLASSES]
        "b_head": b_head.reshape(1, NUM_CLASSES),
    }


@jax.jit
def classifier_forward(x_nchw, params):
    n, c, h, w = x_nchw.shape
    tile_h = _pick_tile_h(h, w)
    n_tiles = h // tile_h

    # NHWC, pad=1 'same', bf16 streaming (MXU operand dtype anyway).
    x = jnp.transpose(x_nchw, (0, 2, 3, 1)).astype(jnp.bfloat16)
    xp = jnp.pad(x, ((0, 0), (1, 1), (1, 1), (0, 0)))
    # Overlapping halo'd row tiles: [N, n_tiles, tile_h+2, W+2, C]  (~(1+2/tile_h)x data).
    rows = jnp.stack(
        [xp[:, t * tile_h:t * tile_h + tile_h + 2] for t in range(n_tiles)], axis=1)

    # Flattened im2col weight [9*C, HID], bf16 (MXU-native).
    w_conv = params["w_conv"].reshape(KSIZE * KSIZE * c, HID).astype(jnp.bfloat16)

    kernel = functools.partial(classifier_kernel, tile_h=tile_h, width=w,
                               cin=c, hw=h * w)
    grid = (n, n_tiles)

    flops = 2 * n * h * w * (KSIZE * KSIZE * c) * HID + 2 * n * HID * NUM_CLASSES
    bytes_accessed = (rows.size * 2 + w_conv.size * 2
                      + params["b_conv"].size * 4 + params["w_head"].size * 4
                      + params["b_head"].size * 4 + n * (HID + NUM_CLASSES) * 4)

    logits3, emb3 = pl.pallas_call(
        kernel,
        grid=grid,
        in_specs=[
            # Halo'd row block; batch/tile dims squeezed out of the kernel ref.
            pl.BlockSpec((None, None, tile_h + 2, w + 2, c),
                         lambda i, j: (i, j, 0, 0, 0)),
            pl.BlockSpec((KSIZE * KSIZE * c, HID), lambda i, j: (0, 0)),
            pl.BlockSpec((1, HID), lambda i, j: (0, 0)),
            pl.BlockSpec((HID, NUM_CLASSES), lambda i, j: (0, 0)),
            pl.BlockSpec((1, NUM_CLASSES), lambda i, j: (0, 0)),
        ],
        out_specs=(
            # Block index constant across j -> resident per-batch blocks
            # (emb doubles as the pooled-sum accumulator).
            pl.BlockSpec((None, 1, NUM_CLASSES), lambda i, j: (i, 0, 0)),
            pl.BlockSpec((None, 1, HID), lambda i, j: (i, 0, 0)),
        ),
        out_shape=(
            jax.ShapeDtypeStruct((n, 1, NUM_CLASSES), jnp.float32),
            jax.ShapeDtypeStruct((n, 1, HID), jnp.float32),
        ),
        compiler_params=pltpu.CompilerParams(
            dimension_semantics=("parallel", "arbitrary"),   # batch shards on megacore
            vmem_limit_bytes=32 * 1024 * 1024,
        ),
        cost_estimate=pl.CostEstimate(flops=flops, transcendentals=0,
                                      bytes_accessed=bytes_accessed),
    )(rows, w_conv, params["b_conv"], params["w_head"], params["b_head"])

    # Forward returns a dict, matching the PyTorch module.
    return {"logits": logits3[:, 0, :], "embeddings": emb3[:, 0, :]}


def reference_forward(x_nchw, params):
    """Plain-JAX f32 reference for a correctness sanity check."""
    n, c, h, w = x_nchw.shape
    x = jnp.transpose(x_nchw, (0, 2, 3, 1))
    xp = jnp.pad(x, ((0, 0), (1, 1), (1, 1), (0, 0)))
    cols = [xp[:, dy:dy + h, dx:dx + w, :] for dy in range(KSIZE) for dx in range(KSIZE)]
    patches = jnp.concatenate(cols, axis=-1).reshape(n * h * w, KSIZE * KSIZE * c)
    w_conv = params["w_conv"].reshape(KSIZE * KSIZE * c, HID)
    conv = jnp.maximum(patches @ w_conv + params["b_conv"], 0.0)
    emb = jnp.mean(conv.reshape(n, h * w, HID), axis=1)
    logits = emb @ params["w_head"] + params["b_head"]
    return {"logits": logits, "embeddings": emb}


if __name__ == "__main__":
    key = jax.random.PRNGKey(0)
    kx, kp = jax.random.split(key)
    x = jax.random.normal(kx, (2, C_IN, 16, 16), jnp.float32)      # NCHW, like PyTorch
    params = init_params(kp)

    out = classifier_forward(x, params)
    jax.block_until_ready(out)

    ref = reference_forward(x, params)
    assert out["logits"].shape == (2, NUM_CLASSES)
    assert out["embeddings"].shape == (2, HID)
    # bf16 MXU operands -> slightly looser tolerance than the pure-f32 reference.
    assert jnp.allclose(out["logits"], ref["logits"], atol=2e-2, rtol=2e-2)
    assert jnp.allclose(out["embeddings"], ref["embeddings"], atol=2e-2, rtol=2e-2)

    print("KERNEL_OK")
</pallas_src>

<mosaic_0001>
module attributes {stable_mosaic.version = 11 : i64} {
  func.func @classifier_kernel(%arg0: i32, %arg1: i32, %arg2: memref<1x1x18x18x4xbf16, #tpu.memory_space<vmem>>, %arg3: memref<36x32xbf16, #tpu.memory_space<vmem>>, %arg4: memref<1x32xf32, #tpu.memory_space<vmem>>, %arg5: memref<32x8xf32, #tpu.memory_space<vmem>>, %arg6: memref<1x8xf32, #tpu.memory_space<vmem>>, %arg7: memref<1x1x8xf32, #tpu.memory_space<vmem>>, %arg8: memref<1x1x32xf32, #tpu.memory_space<vmem>>) attributes {dimension_semantics = [#tpu.dimension_semantics<parallel>, #tpu.dimension_semantics<arbitrary>], iteration_bounds = array<i64: 2, 1>, scalar_prefetch = 0 : i64, scratch_operands = 0 : i64, tpu.core_type = #tpu.core_type<tc>, window_params = [{transform_indices = @transform_0, window_bounds = array<i64: 1, 1, 18, 18, 4>}, {pipeline_mode = #tpu.pipeline_mode<synchronous>, transform_indices = @transform_1, window_bounds = array<i64: 36, 32>}, {pipeline_mode = #tpu.pipeline_mode<synchronous>, transform_indices = @transform_2, window_bounds = array<i64: 1, 32>}, {pipeline_mode = #tpu.pipeline_mode<synchronous>, transform_indices = @transform_3, window_bounds = array<i64: 32, 8>}, {pipeline_mode = #tpu.pipeline_mode<synchronous>, transform_indices = @transform_4, window_bounds = array<i64: 1, 8>}, {transform_indices = @transform_5, window_bounds = array<i64: 1, 1, 8>}, {transform_indices = @transform_6, window_bounds = array<i64: 1, 1, 32>}]} {
    %c0_i32 = arith.constant 0 : i32
    %0 = arith.cmpi eq, %arg1, %c0_i32 : i32
    %1 = arith.extui %0 : i1 to i32
    %c0_i32_0 = arith.constant 0 : i32
    %2 = arith.cmpi ne, %1, %c0_i32_0 : i32
    scf.if %2 {
      %cst_57 = arith.constant 0.000000e+00 : f32
      %41 = vector.broadcast %cst_57 : f32 to vector<1x32xf32>
      %c0_58 = arith.constant 0 : index
      %c0_59 = arith.constant 0 : index
      %c0_60 = arith.constant 0 : index
      %42 = vector.load %arg8[%c0_58, %c0_59, %c0_60] : memref<1x1x32xf32, #tpu.memory_space<vmem>>, vector<1x1x32xf32>
      %43 = vector.shape_cast %42 : vector<1x1x32xf32> to vector<1x32xf32>
      %44 = vector.shape_cast %41 : vector<1x32xf32> to vector<1x1x32xf32>
      tpu.vector_store %arg8[%c0_58, %c0_59, %c0_60], %44 {strides = array<i32>} : memref<1x1x32xf32, #tpu.memory_space<vmem>>, vector<1x1x32xf32>,
    } else {
    }
    %c0 = arith.constant 0 : index
    %c0_1 = arith.constant 0 : index
    %c0_2 = arith.constant 0 : index
    %c0_3 = arith.constant 0 : index
    %c0_4 = arith.constant 0 : index
    %3 = vector.load %arg2[%c0, %c0_1, %c0_2, %c0_3, %c0_4] : memref<1x1x18x18x4xbf16, #tpu.memory_space<vmem>>, vector<1x1x16x16x4xbf16>
    %4 = vector.shape_cast %3 : vector<1x1x16x16x4xbf16> to vector<16x16x4xbf16>
    %c0_5 = arith.constant 0 : index
    %c0_6 = arith.constant 0 : index
    %c0_7 = arith.constant 0 : index
    %c1 = arith.constant 1 : index
    %c0_8 = arith.constant 0 : index
    %5 = vector.load %arg2[%c0_5, %c0_6, %c0_7, %c1, %c0_8] : memref<1x1x18x18x4xbf16, #tpu.memory_space<vmem>>, vector<1x1x16x16x4xbf16>
    %6 = vector.shape_cast %5 : vector<1x1x16x16x4xbf16> to vector<16x16x4xbf16>
    %c0_9 = arith.constant 0 : index
    %c0_10 = arith.constant 0 : index
    %c0_11 = arith.constant 0 : index
    %c2 = arith.constant 2 : index
    %c0_12 = arith.constant 0 : index
    %7 = vector.load %arg2[%c0_9, %c0_10, %c0_11, %c2, %c0_12] : memref<1x1x18x18x4xbf16, #tpu.memory_space<vmem>>, vector<1x1x16x16x4xbf16>
    %8 = vector.shape_cast %7 : vector<1x1x16x16x4xbf16> to vector<16x16x4xbf16>
    %c0_13 = arith.constant 0 : index
    %c0_14 = arith.constant 0 : index
    %c1_15 = arith.constant 1 : index
    %c0_16 = arith.constant 0 : index
    %c0_17 = arith.constant 0 : index
    %9 = vector.load %arg2[%c0_13, %c0_14, %c1_15, %c0_16, %c0_17] : memref<1x1x18x18x4xbf16, #tpu.memory_space<vmem>>, vector<1x1x16x16x4xbf16>
    %10 = vector.shape_cast %9 : vector<1x1x16x16x4xbf16> to vector<16x16x4xbf16>
    %c0_18 = arith.constant 0 : index
    %c0_19 = arith.constant 0 : index
    %c1_20 = arith.constant 1 : index
    %c1_21 = arith.constant 1 : index
    %c0_22 = arith.constant 0 : index
    %11 = vector.load %arg2[%c0_18, %c0_19, %c1_20, %c1_21, %c0_22] : memref<1x1x18x18x4xbf16, #tpu.memory_space<vmem>>, vector<1x1x16x16x4xbf16>
    %12 = vector.shape_cast %11 : vector<1x1x16x16x4xbf16> to vector<16x16x4xbf16>
    %c0_23 = arith.constant 0 : index
    %c0_24 = arith.constant 0 : index
    %c1_25 = arith.constant 1 : index
    %c2_26 = arith.constant 2 : index
    %c0_27 = arith.constant 0 : index
    %13 = vector.load %arg2[%c0_23, %c0_24, %c1_25, %c2_26, %c0_27] : memref<1x1x18x18x4xbf16, #tpu.memory_space<vmem>>, vector<1x1x16x16x4xbf16>
    %14 = vector.shape_cast %13 : vector<1x1x16x16x4xbf16> to vector<16x16x4xbf16>
    %c0_28 = arith.constant 0 : index
    %c0_29 = arith.constant 0 : index
    %c2_30 = arith.constant 2 : index
    %c0_31 = arith.constant 0 : index
    %c0_32 = arith.constant 0 : index
    %15 = vector.load %arg2[%c0_28, %c0_29, %c2_30, %c0_31, %c0_32] : memref<1x1x18x18x4xbf16, #tpu.memory_space<vmem>>, vector<1x1x16x16x4xbf16>
    %16 = vector.shape_cast %15 : vector<1x1x16x16x4xbf16> to vector<16x16x4xbf16>
    %c0_33 = arith.constant 0 : index
    %c0_34 = arith.constant 0 : index
    %c2_35 = arith.constant 2 : index
    %c1_36 = arith.constant 1 : index
    %c0_37 = arith.constant 0 : index
    %17 = vector.load %arg2[%c0_33, %c0_34, %c2_35, %c1_36, %c0_37] : memref<1x1x18x18x4xbf16, #tpu.memory_space<vmem>>, vector<1x1x16x16x4xbf16>
    %18 = vector.shape_cast %17 : vector<1x1x16x16x4xbf16> to vector<16x16x4xbf16>
    %c0_38 = arith.constant 0 : index
    %c0_39 = arith.constant 0 : index
    %c2_40 = arith.constant 2 : index
    %c2_41 = arith.constant 2 : index
    %c0_42 = arith.constant 0 : index
    %19 = vector.load %arg2[%c0_38, %c0_39, %c2_40, %c2_41, %c0_42] : memref<1x1x18x18x4xbf16, #tpu.memory_space<vmem>>, vector<1x1x16x16x4xbf16>
    %20 = vector.shape_cast %19 : vector<1x1x16x16x4xbf16> to vector<16x16x4xbf16>
    %21 = tpu.concatenate %4, %6, %8, %10, %12, %14, %16, %18, %20 in 2 : vector<16x16x4xbf16>, vector<16x16x4xbf16>, vector<16x16x4xbf16>, vector<16x16x4xbf16>, vector<16x16x4xbf16>, vector<16x16x4xbf16>, vector<16x16x4xbf16>, vector<16x16x4xbf16>, vector<16x16x4xbf16> -> vector<16x16x36xbf16>
    %22 = vector.shape_cast %21 : vector<16x16x36xbf16> to vector<256x36xbf16>
    %c0_43 = arith.constant 0 : index
    %c0_44 = arith.constant 0 : index
    %23 = vector.load %arg3[%c0_43, %c0_44] : memref<36x32xbf16, #tpu.memory_space<vmem>>, vector<36x32xbf16>
    %cst = arith.constant dense<0.000000e+00> : vector<256x32xf32>
    %24 = tpu.matmul %22, %23, %cst {dimension_numbers = #tpu.dot_dimension_numbers<[1], [0], [0], [1], [0, 0, 1, 1], [], []>} : vector<256x36xbf16>, vector<36x32xbf16>, vector<256x32xf32> -> vector<256x32xf32>
    %c0_45 = arith.constant 0 : index
    %c0_46 = arith.constant 0 : index
    %25 = vector.load %arg4[%c0_45, %c0_46] : memref<1x32xf32, #tpu.memory_space<vmem>>, vector<1x32xf32>
    %26 = vector.broadcast %25 : vector<1x32xf32> to vector<256x32xf32>
    %27 = arith.addf %24, %26 : vector<256x32xf32>
    %cst_47 = arith.constant 0.000000e+00 : f32
    %28 = vector.broadcast %cst_47 : f32 to vector<256x32xf32>
    %29 = arith.maximumf %27, %28 : vector<256x32xf32>
    %c0_48 = arith.constant 0 : index
    %c0_49 = arith.constant 0 : index
    %c0_50 = arith.constant 0 : index
    %30 = vector.load %arg8[%c0_48, %c0_49, %c0_50] : memref<1x1x32xf32, #tpu.memory_space<vmem>>, vector<1x1x32xf32>
    %31 = vector.shape_cast %30 : vector<1x1x32xf32> to vector<1x32xf32>
    %cst_51 = arith.constant dense<0.000000e+00> : vector<32xf32>
    %32 = vector.multi_reduction <add>, %29, %cst_51 [0] : vector<256x32xf32> to vector<32xf32>
    %33 = vector.shape_cast %32 : vector<32xf32> to vector<1x32xf32>
    %34 = arith.addf %31, %33 : vector<1x32xf32>
    %c0_52 = arith.constant 0 : index
    %c0_53 = arith.constant 0 : index
    %c0_54 = arith.constant 0 : index
    %35 = vector.load %arg8[%c0_52, %c0_53, %c0_54] : memref<1x1x32xf32, #tpu.memory_space<vmem>>, vector<1x1x32xf32>
    %36 = vector.shape_cast %35 : vector<1x1x32xf32> to vector<1x32xf32>
    %37 = vector.shape_cast %34 : vector<1x32xf32> to vector<1x1x32xf32>
    tpu.vector_store %arg8[%c0_52, %c0_53, %c0_54], %37 {strides = array<i32>} : memref<1x1x32xf32, #tpu.memory_space<vmem>>, vector<1x1x32xf32>,
    %c0_i32_55 = arith.constant 0 : i32
    %38 = arith.cmpi eq, %arg1, %c0_i32_55 : i32
    %39 = arith.extui %38 : i1 to i32
    %c0_i32_56 = arith.constant 0 : i32
    %40 = arith.cmpi ne, %39, %c0_i32_56 : i32
    scf.if %40 {
      %c0_57 = arith.constant 0 : index
      %c0_58 = arith.constant 0 : index
      %c0_59 = arith.constant 0 : index
      %41 = vector.load %arg8[%c0_57, %c0_58, %c0_59] : memref<1x1x32xf32, #tpu.memory_space<vmem>>, vector<1x1x32xf32>
      %42 = vector.shape_cast %41 : vector<1x1x32xf32> to vector<1x32xf32>
      %cst_60 = arith.constant 3.906250e-03 : f32
      %43 = vector.broadcast %cst_60 : f32 to vector<1x32xf32>
      %44 = arith.mulf %42, %43 : vector<1x32xf32>
      %c0_61 = arith.constant 0 : index
      %c0_62 = arith.constant 0 : index
      %c0_63 = arith.constant 0 : index
      %45 = vector.load %arg8[%c0_61, %c0_62, %c0_63] : memref<1x1x32xf32, #tpu.memory_space<vmem>>, vector<1x1x32xf32>
      %46 = vector.shape_cast %45 : vector<1x1x32xf32> to vector<1x32xf32>
      %47 = vector.shape_cast %44 : vector<1x32xf32> to vector<1x1x32xf32>
      tpu.vector_store %arg8[%c0_61, %c0_62, %c0_63], %47 {strides = array<i32>} : memref<1x1x32xf32, #tpu.memory_space<vmem>>, vector<1x1x32xf32>,
      %c0_64 = arith.constant 0 : index
      %c0_65 = arith.constant 0 : index
      %48 = vector.load %arg5[%c0_64, %c0_65] : memref<32x8xf32, #tpu.memory_space<vmem>>, vector<32x8xf32>
      %cst_66 = arith.constant dense<0.000000e+00> : vector<1x8xf32>
      %49 = tpu.matmul %44, %48, %cst_66 {dimension_numbers = #tpu.dot_dimension_numbers<[1], [0], [0], [1], [0, 0, 1, 1], [], []>} : vector<1x32xf32>, vector<32x8xf32>, vector<1x8xf32> -> vector<1x8xf32>
      %c0_67 = arith.constant 0 : index
      %c0_68 = arith.constant 0 : index
      %50 = vector.load %arg6[%c0_67, %c0_68] : memref<1x8xf32, #tpu.memory_space<vmem>>, vector<1x8xf32>
      %51 = arith.addf %49, %50 : vector<1x8xf32>
      %c0_69 = arith.constant 0 : index
      %c0_70 = arith.constant 0 : index
      %c0_71 = arith.constant 0 : index
      %52 = vector.load %arg7[%c0_69, %c0_70, %c0_71] : memref<1x1x8xf32, #tpu.memory_space<vmem>>, vector<1x1x8xf32>
      %53 = vector.shape_cast %52 : vector<1x1x8xf32> to vector<1x8xf32>
      %54 = vector.shape_cast %51 : vector<1x8xf32> to vector<1x1x8xf32>
      tpu.vector_store %arg7[%c0_69, %c0_70, %c0_71], %54 {strides = array<i32>} : memref<1x1x8xf32, #tpu.memory_space<vmem>>, vector<1x1x8xf32>,
    } else {
    }
    return
  }
  func.func @transform_0(%arg0: i32, %arg1: i32) -> (i32, i32, i32, i32, i32) {
    %c0_i32 = arith.constant 0 : i32
    %c0_i32_0 = arith.constant 0 : i32
    %c0_i32_1 = arith.constant 0 : i32
    %c0_i32_2 = arith.constant 0 : i32
    return %arg0, %arg1, %c0_i32, %c0_i32_0, %c0_i32_1 : i32, i32, i32, i32, i32
  }
  func.func @transform_1(%arg0: i32, %arg1: i32) -> (i32, i32) {
    %c0_i32 = arith.constant 0 : i32
    %c0_i32_0 = arith.constant 0 : i32
    %c0_i32_1 = arith.constant 0 : i32
    return %c0_i32, %c0_i32_0 : i32, i32
  }
  func.func @transform_2(%arg0: i32, %arg1: i32) -> (i32, i32) {
    %c0_i32 = arith.constant 0 : i32
    %c0_i32_0 = arith.constant 0 : i32
    %c0_i32_1 = arith.constant 0 : i32
    return %c0_i32, %c0_i32_0 : i32, i32
  }
  func.func @transform_3(%arg0: i32, %arg1: i32) -> (i32, i32) {
    %c0_i32 = arith.constant 0 : i32
    %c0_i32_0 = arith.constant 0 : i32
    %c0_i32_1 = arith.constant 0 : i32
    return %c0_i32, %c0_i32_0 : i32, i32
  }
  func.func @transform_4(%arg0: i32, %arg1: i32) -> (i32, i32) {
    %c0_i32 = arith.constant 0 : i32
    %c0_i32_0 = arith.constant 0 : i32
    %c0_i32_1 = arith.constant 0 : i32
    return %c0_i32, %c0_i32_0 : i32, i32
  }
  func.func @transform_5(%arg0: i32, %arg1: i32) -> (i32, i32, i32) {
    %c0_i32 = arith.constant 0 : i32
    %c0_i32_0 = arith.constant 0 : i32
    %c0_i32_1 = arith.constant 0 : i32
    return %arg0, %c0_i32, %c0_i32_0 : i32, i32, i32
  }
  func.func @transform_6(%arg0: i32, %arg1: i32) -> (i32, i32, i32) {
    %c0_i32 = arith.constant 0 : i32
    %c0_i32_0 = arith.constant 0 : i32
    %c0_i32_1 = arith.constant 0 : i32
    return %arg0, %c0_i32, %c0_i32_0 : i32, i32, i32
  }
}

</mosaic_0001>

<llo_original>
// kernel: classifier_forward.1
$region0: #{classifier_forward.1}
  #allocation0 [shape = 'u32[]', space=smem, size = 0x4, offset = 0x4, fixed_abs, tag = 'smem constant byte address 0x4 - core index']
  #allocation1 [shape = 'u32[72,128]{1,0:T(1,128)}', space=vmem, size = 0x9000, scoped, tag = 'internal scratch']
  %s0 = inlined_call_operand.vmem [shape: bf16[2,1,18,18,4], index: 0, kind: input, shape index: {}]
  %s1 = inlined_call_operand.vmem [shape: bf16[36,32], index: 1, kind: input, shape index: {}]
  %s2 = inlined_call_operand.vmem [shape: f32[1,32], index: 2, kind: input, shape index: {}]
  %s3 = inlined_call_operand.vmem [shape: f32[32,8], index: 3, kind: input, shape index: {}]
  %s4 = inlined_call_operand.vmem [shape: f32[1,8], index: 4, kind: input, shape index: {}]
  %s5 = inlined_call_operand.hbm [shape: f32[2,1,8], index: 5, kind: output, shape index: {0}]
  %s6 = inlined_call_operand.hbm [shape: f32[2,1,32], index: 6, kind: output, shape index: {1}]
  %7 = xla_tuple %s5, %s6
  %s8 = sld [smem:[#allocation0]]
  $region69: #{classifier_forward.1} parent=0
    _
  %s10 = ssub.s32 1, %s8
  %s11 = scalar_select 0, %s10, %s8
  $region1: #{classifier_forward.1} parent=0
    #allocation2 [shape = 'u8[1024]{0}', space=vmem, size = 0x400, scoped, tag = 'output window, operand 0']
    #allocation3 [shape = 's32[2]{0}', space=sflag, size = 0x8, scoped, tag = 'scoped memory for classifier_forward.1']
    #allocation4 [shape = 'u8[1024]{0}', space=vmem, size = 0x400, scoped, tag = 'output window, operand 1']
    #allocation5 [shape = 's32[2]{0}', space=sflag, size = 0x8, scoped, tag = 'scoped memory for classifier_forward.1']
    %12 = vsyncpa [#allocation3], 0
    %s13 = scalar_lea.sflag [#allocation3], 1
    %14 = vsyncpa %s13, 0
    %15 = vsyncpa [#allocation5], 0
    %s16 = scalar_lea.sflag [#allocation5], 1
    %17 = vsyncpa %s16, 0
    loop: start=0, step=1, limit=4
    $region2: #{classifier_forward.1} parent=1 // loop_pre_header
      _
    $region3: #{classifier_forward.1} parent=1 // loop_header
      %s19 = sphi 0, %s23
      %p20 = scmp.ge.s32.totalorder %s19, 4
      %s26 = sphi 0, %s38
      %s27 = sphi 0, %s34
      %s28 = sphi 0, %s26
      %s29 = sphi 0, %s27
      %s30 = sphi 0, %s28
      %s31 = sphi 0, %s29
      %s43 = sphi 0, %s45
      %s46 = sphi 0, %s43
      %s47 = sphi 0, %s46
      %s63 = sphi 0, %s47
      %s67 = sphi 0, %s67
      %s69 = sphi 0, %s67
      %s70 = sphi 0, %s69
      %s84 = sphi 0, %s70
      %s88 = sphi 0, %s88
      %s90 = sphi 0, %s88
      %s91 = sphi 0, %s90
      %s105 = sphi 0, %s91
      %s109 = sphi 0, %s109
      %s111 = sphi 0, %s109
      %s112 = sphi 0, %s111
      %s126 = sphi 0, %s112
      %s130 = sphi 0, %s130
      %s132 = sphi 0, %s130
      %s133 = sphi 0, %s132
      %s147 = sphi 0, %s133
      %s153 = sphi 0, %s155
      %s156 = sphi 0, %s153
      %s157 = sphi 0, %s156
      %s173 = sphi 0, %s157
      %s179 = sphi 0, %s181
      %s182 = sphi 0, %s179
      %s183 = sphi 0, %s182
      %s199 = sphi 0, %s183
    $region4: #{classifier_forward.1} parent=1 // loop_header_branch
      %22 = sbr.rel (%p20) target = $region8
    $region5: #{classifier_forward.1} parent=1 // loop_body
      %s24 = ssub.s32 %s19, 1
      %s25 = ssub.s32 %s19, 2
      %s32 = sadd.s32 1, %s27
      %p33 = scmp.ge.s32.totalorder %s32, 1
      %s34 = scalar_select %p33, 0, %s32
      %s35 = sadd.s32 1, %s26
      %s36 = scalar_select %p33, %s35, %s26
      %p37 = scmp.ge.s32.totalorder %s36, 2
      %s38 = scalar_select %p37, 0, %s36
      %s39 = ssub.s32 %s26, %s38
      %s40 = ssub.s32 %s27, %s34
      %s41 = sor.u32 %s39, %s40
      %p42 = scmp.eq.s32.totalorder %s41, 0
      %s44 = sadd.s32 %s43, 1
      %s45 = scalar_select %p42, %s43, %s44
      %p48 = pneg %p42
      %p49 = scmp.eq.s32.totalorder %s19, 1
      %p50 = por %p48, %p49
      %p51 = scmp.ne.s32.totalorder %s43, %s46
      %p52 = scmp.eq.s32.totalorder %s19, 0
      %p53 = por %p51, %p52
      %p54 = scmp.ne.s32.totalorder %s43, %s46
      %p55 = scmp.eq.s32.totalorder %s24, 1
      %p56 = por %p54, %p55
      %p57 = scmp.ne.s32.totalorder %s46, %s47
      %p58 = scmp.eq.s32.totalorder %s24, 0
      %p59 = por %p57, %p58
      %p60 = scmp.ne.s32.totalorder %s46, %s47
      %p61 = scmp.eq.s32.totalorder %s25, 1
      %p62 = por %p60, %p61
      %p64 = scmp.ne.s32.totalorder %s47, %s63
      %p65 = scmp.eq.s32.totalorder %s25, 0
      %p66 = por %p64, %p65
      %s68 = sadd.s32 %s67, 1
      %p71 = scmp.eq.s32.totalorder %s19, 1
      %p72 = scmp.ne.s32.totalorder %s67, %s69
      %p73 = scmp.eq.s32.totalorder %s19, 0
      %p74 = por %p72, %p73
      %p75 = scmp.ne.s32.totalorder %s67, %s69
      %p76 = scmp.eq.s32.totalorder %s24, 1
      %p77 = por %p75, %p76
      %p78 = scmp.ne.s32.totalorder %s69, %s70
      %p79 = scmp.eq.s32.totalorder %s24, 0
      %p80 = por %p78, %p79
      %p81 = scmp.ne.s32.totalorder %s69, %s70
      %p82 = scmp.eq.s32.totalorder %s25, 1
      %p83 = por %p81, %p82
      %p85 = scmp.ne.s32.totalorder %s70, %s84
      %p86 = scmp.eq.s32.totalorder %s25, 0
      %p87 = por %p85, %p86
      %s89 = sadd.s32 %s88, 1
      %p92 = scmp.eq.s32.totalorder %s19, 1
      %p93 = scmp.ne.s32.totalorder %s88, %s90
      %p94 = scmp.eq.s32.totalorder %s19, 0
      %p95 = por %p93, %p94
      %p96 = scmp.ne.s32.totalorder %s88, %s90
      %p97 = scmp.eq.s32.totalorder %s24, 1
      %p98 = por %p96, %p97
      %p99 = scmp.ne.s32.totalorder %s90, %s91
      %p100 = scmp.eq.s32.totalorder %s24, 0
      %p101 = por %p99, %p100
      %p102 = scmp.ne.s32.totalorder %s90, %s91
      %p103 = scmp.eq.s32.totalorder %s25, 1
      %p104 = por %p102, %p103
      %p106 = scmp.ne.s32.totalorder %s91, %s105
      %p107 = scmp.eq.s32.totalorder %s25, 0
      %p108 = por %p106, %p107
      %s110 = sadd.s32 %s109, 1
      %p113 = scmp.eq.s32.totalorder %s19, 1
      %p114 = scmp.ne.s32.totalorder %s109, %s111
      %p115 = scmp.eq.s32.totalorder %s19, 0
      %p116 = por %p114, %p115
      %p117 = scmp.ne.s32.totalorder %s109, %s111
      %p118 = scmp.eq.s32.totalorder %s24, 1
      %p119 = por %p117, %p118
      %p120 = scmp.ne.s32.totalorder %s111, %s112
      %p121 = scmp.eq.s32.totalorder %s24, 0
      %p122 = por %p120, %p121
      %p123 = scmp.ne.s32.totalorder %s111, %s112
      %p124 = scmp.eq.s32.totalorder %s25, 1
      %p125 = por %p123, %p124
      %p127 = scmp.ne.s32.totalorder %s112, %s126
      %p128 = scmp.eq.s32.totalorder %s25, 0
      %p129 = por %p127, %p128
      %s131 = sadd.s32 %s130, 1
      %p134 = scmp.eq.s32.totalorder %s19, 1
      %p135 = scmp.ne.s32.totalorder %s130, %s132
      %p136 = scmp.eq.s32.totalorder %s19, 0
      %p137 = por %p135, %p136
      %p138 = scmp.ne.s32.totalorder %s130, %s132
      %p139 = scmp.eq.s32.totalorder %s24, 1
      %p140 = por %p138, %p139
      %p141 = scmp.ne.s32.totalorder %s132, %s133
      %p142 = scmp.eq.s32.totalorder %s24, 0
      %p143 = por %p141, %p142
      %p144 = scmp.ne.s32.totalorder %s132, %s133
      %p145 = scmp.eq.s32.totalorder %s25, 1
      %p146 = por %p144, %p145
      %p148 = scmp.ne.s32.totalorder %s133, %s147
      %p149 = scmp.eq.s32.totalorder %s25, 0
      %p150 = por %p148, %p149
      %s151 = ssub.s32 %s26, %s38
      %p152 = scmp.eq.s32.totalorder %s151, 0
      %s154 = sadd.s32 %s153, 1
      %s155 = scalar_select %p152, %s153, %s154
      %p158 = pneg %p152
      %p159 = scmp.eq.s32.totalorder %s19, 1
      %p160 = por %p158, %p159
      %p161 = scmp.ne.s32.totalorder %s153, %s156
      %p162 = scmp.eq.s32.totalorder %s19, 0
      %p163 = por %p161, %p162
      %p164 = scmp.ne.s32.totalorder %s153, %s156
      %p165 = scmp.eq.s32.totalorder %s24, 1
      %p166 = por %p164, %p165
      %p167 = scmp.ne.s32.totalorder %s156, %s157
      %p168 = scmp.eq.s32.totalorder %s24, 0
      %p169 = por %p167, %p168
      %p170 = scmp.ne.s32.totalorder %s156, %s157
      %p171 = scmp.eq.s32.totalorder %s25, 1
      %p172 = por %p170, %p171
      %p174 = scmp.ne.s32.totalorder %s157, %s173
      %p175 = scmp.eq.s32.totalorder %s25, 0
      %p176 = por %p174, %p175
      %s177 = ssub.s32 %s26, %s38
      %p178 = scmp.eq.s32.totalorder %s177, 0
      %s180 = sadd.s32 %s179, 1
      %s181 = scalar_select %p178, %s179, %s180
      %p184 = pneg %p178
      %p185 = scmp.eq.s32.totalorder %s19, 1
      %p186 = por %p184, %p185
      %p187 = scmp.ne.s32.totalorder %s179, %s182
      %p188 = scmp.eq.s32.totalorder %s19, 0
      %p189 = por %p187, %p188
      %p190 = scmp.ne.s32.totalorder %s179, %s182
      %p191 = scmp.eq.s32.totalorder %s24, 1
      %p192 = por %p190, %p191
      %p193 = scmp.ne.s32.totalorder %s182, %s183
      %p194 = scmp.eq.s32.totalorder %s24, 0
      %p195 = por %p193, %p194
      %p196 = scmp.ne.s32.totalorder %s182, %s183
      %p197 = scmp.eq.s32.totalorder %s25, 1
      %p198 = por %p196, %p197
      %p200 = scmp.ne.s32.totalorder %s183, %s199
      %p201 = scmp.eq.s32.totalorder %s25, 0
      %p202 = por %p200, %p201
      %p203 = scmp.le.s32.totalorder 1, %s19
      %p204 = scmp.lt.s32.totalorder %s19, 3
      %p205 = pnand %p203, %p204
      %p206 = pneg %p205
      // Predicated region
      $region9: #{classifier_forward.1} parent=5 // pred_check
        _
      $region10: #{classifier_forward.1} parent=5 // pred_check_branch
        %208 = sbr.rel (%p205) target = $region12
      $region11: #{classifier_forward.1} parent=5 // pred_region
        %s209 = ssub.s32 %s19, 1
        // Predicated region
        $region13: #{classifier_forward.1} parent=11 // pred_check
          %p210 = pneg %p80
        $region14: #{classifier_forward.1} parent=11 // pred_check_branch
          %212 = sbr.rel (%p210) target = $region16
        $region15: #{classifier_forward.1} parent=11 // pred_region
          _
        $region16: #{classifier_forward.1} parent=11 // pred_fallthru
          _
        // Predicated region
        $region17: #{classifier_forward.1} parent=11 // pred_check
          %p213 = pneg %p101
        $region18: #{classifier_forward.1} parent=11 // pred_check_branch
          %215 = sbr.rel (%p213) target = $region20
        $region19: #{classifier_forward.1} parent=11 // pred_region
          _
        $region20: #{classifier_forward.1} parent=11 // pred_fallthru
          _
        // Predicated region
        $region21: #{classifier_forward.1} parent=11 // pred_check
          %p216 = pneg %p122
        $region22: #{classifier_forward.1} parent=11 // pred_check_branch
          %218 = sbr.rel (%p216) target = $region24
        $region23: #{classifier_forward.1} parent=11 // pred_region
          _
        $region24: #{classifier_forward.1} parent=11 // pred_fallthru
          _
        // Predicated region
        $region25: #{classifier_forward.1} parent=11 // pred_check
          %p219 = pneg %p143
        $region26: #{classifier_forward.1} parent=11 // pred_check_branch
          %221 = sbr.rel (%p219) target = $region28
        $region27: #{classifier_forward.1} parent=11 // pred_region
          _
        $region28: #{classifier_forward.1} parent=11 // pred_fallthru
          _
      $region12: #{classifier_forward.1} parent=5 // pred_fallthru
        _
      %p222 = scmp.lt.s32.totalorder %s19, 2
      // Predicated region
      $region29: #{classifier_forward.1} parent=5 // pred_check
        %p223 = pneg %p222
      $region30: #{classifier_forward.1} parent=5 // pred_check_branch
        %225 = sbr.rel (%p223) target = $region32
      $region31: #{classifier_forward.1} parent=5 // pred_region
        // Predicated region
        $region33: #{classifier_forward.1} parent=31 // pred_check
          %p226 = pneg %p53
        $region34: #{classifier_forward.1} parent=31 // pred_check_branch
          %228 = sbr.rel (%p226) target = $region36
        $region35: #{classifier_forward.1} parent=31 // pred_region
          %p229 = scmp.lt.s32.totalorder %s26, 1
          %s230 = scalar_select %p229, %s26, 1
          %p231 = scmp.lt.s32.totalorder %s27, 0
          %s232 = scalar_select %p231, %s27, 0
          %s233 = smul.addr %s232, 54
          %s234 = smul.addr %s230, 54
          %s235 = sadd.s32 %s233, %s234
          %s236 = smul.addr %s235, 4
          %s237 = scalar_lea.vmem %s0, %s236
        $region36: #{classifier_forward.1} parent=31 // pred_fallthru
          _
      $region32: #{classifier_forward.1} parent=5 // pred_fallthru
        _
      %p238 = scmp.le.s32.totalorder 1, %s19
      %p239 = scmp.lt.s32.totalorder %s19, 3
      %p240 = pnand %p238, %p239
      %p241 = pneg %p240
      // Predicated region
      $region37: #{classifier_forward.1} parent=5 // pred_check
        _
      $region38: #{classifier_forward.1} parent=5 // pred_check_branch
        %243 = sbr.rel (%p240) target = $region40
      $region39: #{classifier_forward.1} parent=5 // pred_region
        %s244 = ssub.s32 %s19, 1
        %p245 = scmp.lt.s32.totalorder %s28, 1
        %s246 = scalar_select %p245, %s28, 1
        %p247 = scmp.lt.s32.totalorder %s29, 0
        %s248 = scalar_select %p247, %s29, 0
        %s249 = smul.addr %s248, 54
        %s250 = smul.addr %s246, 54
        %s251 = sadd.s32 %s249, %s250
        %s252 = smul.addr %s251, 4
        %s253 = scalar_lea.vmem %s0, %s252
        %p254 = pneg %p59
        %p255 = pneg %p56
        %p256 = pneg %p80
        %p257 = pneg %p77
        %p258 = pneg %p101
        %p259 = pneg %p98
        %p260 = pneg %p122
        %p261 = pneg %p119
        %p262 = pneg %p143
        %p263 = pneg %p140
        %p264 = pneg %p169
        %p265 = pneg %p166
        %s266 = sand.u32 %s156, 1
        %s267 = scalar_lea.sflag [#allocation3], %s266
        %s268 = sand.u32 %s156, 1
        %s269 = scalar_lea.vmem [#allocation2], %s268
        %p270 = pneg %p195
        %p271 = pneg %p192
        %s272 = sand.u32 %s182, 1
        %s273 = scalar_lea.sflag [#allocation5], %s272
        %s274 = sand.u32 %s182, 1
        %s275 = scalar_lea.vmem [#allocation4], %s274
        %p276 = scmp.lt.s32.totalorder %s28, 1
        %s277 = scalar_select %p276, %s28, 1
        %p278 = scmp.lt.s32.totalorder %s29, 0
        %s279 = scalar_select %p278, %s29, 0
        %s280 = smul.addr %s279, 54
        %s281 = smul.addr %s277, 54
        %s282 = sadd.s32 %s280, %s281
        %s283 = smul.addr %s282, 4
        %s284 = scalar_lea.vmem %s0, %s283
        %p286 = scmp.eq.s32.totalorder %s29, 0
        // Predicated region
        $region41: #{classifier_forward.1} parent=39 // pred_check
          %p287 = pneg %p286
        $region42: #{classifier_forward.1} parent=39 // pred_check_branch
          %289 = sbr.rel (%p287) target = $region44
        $region43: #{classifier_forward.1} parent=39 // pred_region
          %vm290 = vcmask 253952
          %291 = vst.msk [vmem:[%s275] sm:$0x1] %vm290, 0.0
        $region44: #{classifier_forward.1} parent=39 // pred_fallthru
          _
        %v292 = vld [vmem:[%s284] sm:$0xf]
        %v293 = vld [vmem:[%s284 + $0x4] sm:$0xf]
        %v294 = vld [vmem:[%s284 + $0xc] sm:$0xf]
        %v295 = vld [vmem:[%s284 + $0x10] sm:$0xf]
        %v296 = vld [vmem:[%s284 + $0x18] sm:$0xf]
        %v297 = vld [vmem:[%s284 + $0x1c] sm:$0xf]
        %v298 = vld [vmem:[%s284 + $0x24] sm:$0xf]
        %v299 = vld [vmem:[%s284 + $0x28] sm:$0xf]
        %v300 = vld [vmem:[%s284 + $0x30] sm:$0xf]
        %v301 = vld [vmem:[%s284 + $0x34] sm:$0xf]
        %v302 = vld [vmem:[%s284 + $0x3c] sm:$0xf]
        %v303 = vld [vmem:[%s284 + $0x40] sm:$0xf]
        %v304 = vld [vmem:[%s284 + $0x48] sm:$0xf]
        %v305 = vld [vmem:[%s284 + $0x4c] sm:$0xf]
        %v306 = vld [vmem:[%s284 + $0x54] sm:$0xf]
        %v307 = vld [vmem:[%s284 + $0x58] sm:$0xf]
        %v308 = vld [vmem:[%s284 + $0x60] sm:$0xf]
        %v309 = vld [vmem:[%s284 + $0x64] sm:$0xf]
        %v310 = vld [vmem:[%s284 + $0x6c] sm:$0xf]
        %v311 = vld [vmem:[%s284 + $0x70] sm:$0xf]
        %v312 = vld [vmem:[%s284 + $0x78] sm:$0xf]
        %v313 = vld [vmem:[%s284 + $0x7c] sm:$0xf]
        %v314 = vld [vmem:[%s284 + $0x84] sm:$0xf]
        %v315 = vld [vmem:[%s284 + $0x88] sm:$0xf]
        %v316 = vld [vmem:[%s284 + $0x90] sm:$0xf]
        %v317 = vld [vmem:[%s284 + $0x94] sm:$0xf]
        %v318 = vld [vmem:[%s284 + $0x9c] sm:$0xf]
        %v319 = vld [vmem:[%s284 + $0xa0] sm:$0xf]
        %v320 = vld [vmem:[%s284 + $0xa8] sm:$0xf]
        %v321 = vld [vmem:[%s284 + $0xac] sm:$0xf]
        %v322 = vld [vmem:[%s284 + $0xb4] sm:$0xf]
        %v323 = vld [vmem:[%s284 + $0xb8] sm:$0xf]
        %v324 = vld [vmem:[%s284 + $0x8] sm:$0x1]
        %v325 = vld [vmem:[%s284 + $0x14] sm:$0x1]
        %v326 = vld [vmem:[%s284 + $0x20] sm:$0x1]
        %v327 = vld [vmem:[%s284 + $0x2c] sm:$0x1]
        %v328 = vld [vmem:[%s284 + $0x38] sm:$0x1]
        %v329 = vld [vmem:[%s284 + $0x44] sm:$0x1]
        %v330 = vld [vmem:[%s284 + $0x50] sm:$0x1]
        %v331 = vld [vmem:[%s284 + $0x5c] sm:$0x1]
        %v332 = vld [vmem:[%s284 + $0x68] sm:$0x1]
        %v333 = vld [vmem:[%s284 + $0x74] sm:$0x1]
        %v334 = vld [vmem:[%s284 + $0x80] sm:$0x1]
        %v335 = vld [vmem:[%s284 + $0x8c] sm:$0x1]
        %v336 = vld [vmem:[%s284 + $0x98] sm:$0x1]
        %v337 = vld [vmem:[%s284 + $0xa4] sm:$0x1]
        %v338 = vld [vmem:[%s284 + $0xb0] sm:$0x1]
        %v339 = vld [vmem:[%s284 + $0xbc] sm:$0x1]
        %v340 = vld [vmem:[%s284] sm:$0xe]
        %v341 = vld [vmem:[%s284 + $0xc] sm:$0xe]
        %v342 = vld [vmem:[%s284 + $0x18] sm:$0xe]
        %v343 = vld [vmem:[%s284 + $0x24] sm:$0xe]
        %v344 = vld [vmem:[%s284 + $0x30] sm:$0xe]
        %v345 = vld [vmem:[%s284 + $0x3c] sm:$0xe]
        %v346 = vld [vmem:[%s284 + $0x48] sm:$0xe]
        %v347 = vld [vmem:[%s284 + $0x54] sm:$0xe]
        %v348 = vld [vmem:[%s284 + $0x60] sm:$0xe]
        %v349 = vld [vmem:[%s284 + $0x6c] sm:$0xe]
        %v350 = vld [vmem:[%s284 + $0x78] sm:$0xe]
        %v351 = vld [vmem:[%s284 + $0x84] sm:$0xe]
        %v352 = vld [vmem:[%s284 + $0x90] sm:$0xe]
        %v353 = vld [vmem:[%s284 + $0x9c] sm:$0xe]
        %v354 = vld [vmem:[%s284 + $0xa8] sm:$0xe]
        %v355 = vld [vmem:[%s284 + $0xb4] sm:$0xe]
        %s356 = scalar_lea.vmem %s284, 12
        %v357 = vld [vmem:[%s356] sm:$0xf]
        %v358 = vld [vmem:[%s356 + $0x4] sm:$0xf]
        %v359 = vld [vmem:[%s356 + $0xc] sm:$0xf]
        %v360 = vld [vmem:[%s356 + $0x10] sm:$0xf]
        %v361 = vld [vmem:[%s356 + $0x18] sm:$0xf]
        %v362 = vld [vmem:[%s356 + $0x1c] sm:$0xf]
        %v363 = vld [vmem:[%s356 + $0x24] sm:$0xf]
        %v364 = vld [vmem:[%s356 + $0x28] sm:$0xf]
        %v365 = vld [vmem:[%s356 + $0x30] sm:$0xf]
        %v366 = vld [vmem:[%s356 + $0x34] sm:$0xf]
        %v367 = vld [vmem:[%s356 + $0x3c] sm:$0xf]
        %v368 = vld [vmem:[%s356 + $0x40] sm:$0xf]
        %v369 = vld [vmem:[%s356 + $0x48] sm:$0xf]
        %v370 = vld [vmem:[%s356 + $0x4c] sm:$0xf]
        %v371 = vld [vmem:[%s356 + $0x54] sm:$0xf]
        %v372 = vld [vmem:[%s356 + $0x58] sm:$0xf]
        %v373 = vld [vmem:[%s356 + $0x60] sm:$0xf]
        %v374 = vld [vmem:[%s356 + $0x64] sm:$0xf]
        %v375 = vld [vmem:[%s356 + $0x6c] sm:$0xf]
        %v376 = vld [vmem:[%s356 + $0x70] sm:$0xf]
        %v377 = vld [vmem:[%s356 + $0x78] sm:$0xf]
        %v378 = vld [vmem:[%s356 + $0x7c] sm:$0xf]
        %v379 = vld [vmem:[%s356 + $0x84] sm:$0xf]
        %v380 = vld [vmem:[%s356 + $0x88] sm:$0xf]
        %v381 = vld [vmem:[%s356 + $0x90] sm:$0xf]
        %v382 = vld [vmem:[%s356 + $0x94] sm:$0xf]
        %v383 = vld [vmem:[%s356 + $0x9c] sm:$0xf]
        %v384 = vld [vmem:[%s356 + $0xa0] sm:$0xf]
        %v385 = vld [vmem:[%s356 + $0xa8] sm:$0xf]
        %v386 = vld [vmem:[%s356 + $0xac] sm:$0xf]
        %v387 = vld [vmem:[%s356 + $0xb4] sm:$0xf]
        %v388 = vld [vmem:[%s356 + $0xb8] sm:$0xf]
        %v389 = vld [vmem:[%s356 + $0x8] sm:$0x1]
        %v390 = vld [vmem:[%s356 + $0x14] sm:$0x1]
        %v391 = vld [vmem:[%s356 + $0x20] sm:$0x1]
        %v392 = vld [vmem:[%s356 + $0x2c] sm:$0x1]
        %v393 = vld [vmem:[%s356 + $0x38] sm:$0x1]
        %v394 = vld [vmem:[%s356 + $0x44] sm:$0x1]
        %v395 = vld [vmem:[%s356 + $0x50] sm:$0x1]
        %v396 = vld [vmem:[%s356 + $0x5c] sm:$0x1]
        %v397 = vld [vmem:[%s356 + $0x68] sm:$0x1]
        %v398 = vld [vmem:[%s356 + $0x74] sm:$0x1]
        %v399 = vld [vmem:[%s356 + $0x80] sm:$0x1]
        %v400 = vld [vmem:[%s356 + $0x8c] sm:$0x1]
        %v401 = vld [vmem:[%s356 + $0x98] sm:$0x1]
        %v402 = vld [vmem:[%s356 + $0xa4] sm:$0x1]
        %v403 = vld [vmem:[%s356 + $0xb0] sm:$0x1]
        %v404 = vld [vmem:[%s356 + $0xbc] sm:$0x1]
        %v405 = vld [vmem:[%s356] sm:$0xe]
        %v406 = vld [vmem:[%s356 + $0xc] sm:$0xe]
        %v407 = vld [vmem:[%s356 + $0x18] sm:$0xe]
        %v408 = vld [vmem:[%s356 + $0x24] sm:$0xe]
        %v409 = vld [vmem:[%s356 + $0x30] sm:$0xe]
        %v410 = vld [vmem:[%s356 + $0x3c] sm:$0xe]
        %v411 = vld [vmem:[%s356 + $0x48] sm:$0xe]
        %v412 = vld [vmem:[%s356 + $0x54] sm:$0xe]
        %v413 = vld [vmem:[%s356 + $0x60] sm:$0xe]
        %v414 = vld [vmem:[%s356 + $0x6c] sm:$0xe]
        %v415 = vld [vmem:[%s356 + $0x78] sm:$0xe]
        %v416 = vld [vmem:[%s356 + $0x84] sm:$0xe]
        %v417 = vld [vmem:[%s356 + $0x90] sm:$0xe]
        %v418 = vld [vmem:[%s356 + $0x9c] sm:$0xe]
        %v419 = vld [vmem:[%s356 + $0xa8] sm:$0xe]
        %v420 = vld [vmem:[%s356 + $0xb4] sm:$0xe]
        %s421 = scalar_lea.vmem %s284, 24
        %v422 = vld [vmem:[%s421] sm:$0xf]
        %v423 = vld [vmem:[%s421 + $0x4] sm:$0xf]
        %v424 = vld [vmem:[%s421 + $0xc] sm:$0xf]
        %v425 = vld [vmem:[%s421 + $0x10] sm:$0xf]
        %v426 = vld [vmem:[%s421 + $0x18] sm:$0xf]
        %v427 = vld [vmem:[%s421 + $0x1c] sm:$0xf]
        %v428 = vld [vmem:[%s421 + $0x24] sm:$0xf]
        %v429 = vld [vmem:[%s421 + $0x28] sm:$0xf]
        %v430 = vld [vmem:[%s421 + $0x30] sm:$0xf]
        %v431 = vld [vmem:[%s421 + $0x34] sm:$0xf]
        %v432 = vld [vmem:[%s421 + $0x3c] sm:$0xf]
        %v433 = vld [vmem:[%s421 + $0x40] sm:$0xf]
        %v434 = vld [vmem:[%s421 + $0x48] sm:$0xf]
        %v435 = vld [vmem:[%s421 + $0x4c] sm:$0xf]
        %v436 = vld [vmem:[%s421 + $0x54] sm:$0xf]
        %v437 = vld [vmem:[%s421 + $0x58] sm:$0xf]
        %v438 = vld [vmem:[%s421 + $0x60] sm:$0xf]
        %v439 = vld [vmem:[%s421 + $0x64] sm:$0xf]
        %v440 = vld [vmem:[%s421 + $0x6c] sm:$0xf]
        %v441 = vld [vmem:[%s421 + $0x70] sm:$0xf]
        %v442 = vld [vmem:[%s421 + $0x78] sm:$0xf]
        %v443 = vld [vmem:[%s421 + $0x7c] sm:$0xf]
        %v444 = vld [vmem:[%s421 + $0x84] sm:$0xf]
        %v445 = vld [vmem:[%s421 + $0x88] sm:$0xf]
        %v446 = vld [vmem:[%s421 + $0x90] sm:$0xf]
        %v447 = vld [vmem:[%s421 + $0x94] sm:$0xf]
        %v448 = vld [vmem:[%s421 + $0x9c] sm:$0xf]
        %v449 = vld [vmem:[%s421 + $0xa0] sm:$0xf]
        %v450 = vld [vmem:[%s421 + $0xa8] sm:$0xf]
        %v451 = vld [vmem:[%s421 + $0xac] sm:$0xf]
        %v452 = vld [vmem:[%s421 + $0xb4] sm:$0xf]
        %v453 = vld [vmem:[%s421 + $0xb8] sm:$0xf]
        %v454 = vld [vmem:[%s421 + $0x8] sm:$0x1]
        %v455 = vld [vmem:[%s421 + $0x14] sm:$0x1]
        %v456 = vld [vmem:[%s421 + $0x20] sm:$0x1]
        %v457 = vld [vmem:[%s421 + $0x2c] sm:$0x1]
        %v458 = vld [vmem:[%s421 + $0x38] sm:$0x1]
        %v459 = vld [vmem:[%s421 + $0x44] sm:$0x1]
        %v460 = vld [vmem:[%s421 + $0x50] sm:$0x1]
        %v461 = vld [vmem:[%s421 + $0x5c] sm:$0x1]
        %v462 = vld [vmem:[%s421 + $0x68] sm:$0x1]
        %v463 = vld [vmem:[%s421 + $0x74] sm:$0x1]
        %v464 = vld [vmem:[%s421 + $0x80] sm:$0x1]
        %v465 = vld [vmem:[%s421 + $0x8c] sm:$0x1]
        %v466 = vld [vmem:[%s421 + $0x98] sm:$0x1]
        %v467 = vld [vmem:[%s421 + $0xa4] sm:$0x1]
        %v468 = vld [vmem:[%s421 + $0xb0] sm:$0x1]
        %v469 = vld [vmem:[%s421 + $0xbc] sm:$0x1]
        %v470 = vld [vmem:[%s421] sm:$0xe]
        %v471 = vld [vmem:[%s421 + $0xc] sm:$0xe]
        %v472 = vld [vmem:[%s421 + $0x18] sm:$0xe]
        %v473 = vld [vmem:[%s421 + $0x24] sm:$0xe]
        %v474 = vld [vmem:[%s421 + $0x30] sm:$0xe]
        %v475 = vld [vmem:[%s421 + $0x3c] sm:$0xe]
        %v476 = vld [vmem:[%s421 + $0x48] sm:$0xe]
        %v477 = vld [vmem:[%s421 + $0x54] sm:$0xe]
        %v478 = vld [vmem:[%s421 + $0x60] sm:$0xe]
        %v479 = vld [vmem:[%s421 + $0x6c] sm:$0xe]
        %v480 = vld [vmem:[%s421 + $0x78] sm:$0xe]
        %v481 = vld [vmem:[%s421 + $0x84] sm:$0xe]
        %v482 = vld [vmem:[%s421 + $0x90] sm:$0xe]
        %v483 = vld [vmem:[%s421 + $0x9c] sm:$0xe]
        %v484 = vld [vmem:[%s421 + $0xa8] sm:$0xe]
        %v485 = vld [vmem:[%s421 + $0xb4] sm:$0xe]
        %v518 = vunpack.c.l.b16 %v292
        %v519 = vunpack.c.l.b16 %v293
        %v520 = vunpack.c.l.b16 %v294
        %v521 = vunpack.c.l.b16 %v295
        %v522 = vunpack.c.l.b16 %v296
        %v523 = vunpack.c.l.b16 %v297
        %v524 = vunpack.c.l.b16 %v298
        %v525 = vunpack.c.l.b16 %v299
        %v526 = vunpack.c.l.b16 %v300
        %v527 = vunpack.c.l.b16 %v301
        %v528 = vunpack.c.l.b16 %v302
        %v529 = vunpack.c.l.b16 %v303
        %v530 = vunpack.c.l.b16 %v304
        %v531 = vunpack.c.l.b16 %v305
        %v532 = vunpack.c.l.b16 %v306
        %v533 = vunpack.c.l.b16 %v307
        %v534 = vunpack.c.l.b16 %v308
        %v535 = vunpack.c.l.b16 %v309
        %v536 = vunpack.c.l.b16 %v310
        %v537 = vunpack.c.l.b16 %v311
        %v538 = vunpack.c.l.b16 %v312
        %v539 = vunpack.c.l.b16 %v313
        %v540 = vunpack.c.l.b16 %v314
        %v541 = vunpack.c.l.b16 %v315
        %v542 = vunpack.c.l.b16 %v316
        %v543 = vunpack.c.l.b16 %v317
        %v544 = vunpack.c.l.b16 %v318
        %v545 = vunpack.c.l.b16 %v319
        %v546 = vunpack.c.l.b16 %v320
        %v547 = vunpack.c.l.b16 %v321
        %v548 = vunpack.c.l.b16 %v322
        %v549 = vunpack.c.l.b16 %v323
        %v550 = vpack.c.b16 %v519, %v518
        %v551 = vpack.c.b16 %v521, %v520
        %v552 = vpack.c.b16 %v523, %v522
        %v553 = vpack.c.b16 %v525, %v524
        %v554 = vpack.c.b16 %v527, %v526
        %v555 = vpack.c.b16 %v529, %v528
        %v556 = vpack.c.b16 %v531, %v530
        %v557 = vpack.c.b16 %v533, %v532
        %v558 = vpack.c.b16 %v535, %v534
        %v559 = vpack.c.b16 %v537, %v536
        %v560 = vpack.c.b16 %v539, %v538
        %v561 = vpack.c.b16 %v541, %v540
        %v562 = vpack.c.b16 %v543, %v542
        %v563 = vpack.c.b16 %v545, %v544
        %v564 = vpack.c.b16 %v547, %v546
        %v565 = vpack.c.b16 %v549, %v548
        %v582 = vunpack.c.l.b16 %v324
        %v583 = vunpack.c.l.b16 %v325
        %v584 = vunpack.c.l.b16 %v326
        %v585 = vunpack.c.l.b16 %v327
        %v586 = vunpack.c.l.b16 %v328
        %v587 = vunpack.c.l.b16 %v329
        %v588 = vunpack.c.l.b16 %v330
        %v589 = vunpack.c.l.b16 %v331
        %v590 = vunpack.c.l.b16 %v332
        %v591 = vunpack.c.l.b16 %v333
        %v592 = vunpack.c.l.b16 %v334
        %v593 = vunpack.c.l.b16 %v335
        %v594 = vunpack.c.l.b16 %v336
        %v595 = vunpack.c.l.b16 %v337
        %v596 = vunpack.c.l.b16 %v338
        %v597 = vunpack.c.l.b16 %v339
        %v598 = vpack.c.b16 %v582, %v582
        %v599 = vpack.c.b16 %v583, %v583
        %v600 = vpack.c.b16 %v584, %v584
        %v601 = vpack.c.b16 %v585, %v585
        %v602 = vpack.c.b16 %v586, %v586
        %v603 = vpack.c.b16 %v587, %v587
        %v604 = vpack.c.b16 %v588, %v588
        %v605 = vpack.c.b16 %v589, %v589
        %v606 = vpack.c.b16 %v590, %v590
        %v607 = vpack.c.b16 %v591, %v591
        %v608 = vpack.c.b16 %v592, %v592
        %v609 = vpack.c.b16 %v593, %v593
        %v610 = vpack.c.b16 %v594, %v594
        %v611 = vpack.c.b16 %v595, %v595
        %v612 = vpack.c.b16 %v596, %v596
        %v613 = vpack.c.b16 %v597, %v597
        %vm614 = vsmask.f32 7424
        %v616 = vshrl.u32 %v550, 16
        %v618 = vshll.u32 %v550, 16
        %v620 = vrot.slane %v618, 1
        %v621 = vor.u32 %v616, %v620
        %v623 = vshll.u32 %v598, 16
        %v625 = vrot.slane %v623, 1
        %v626 = vsel %vm614, %v621, %v625
        %v628 = vshrl.u32 %v551, 16
        %v630 = vshll.u32 %v551, 16
        %v632 = vrot.slane %v630, 1
        %v633 = vor.u32 %v628, %v632
        %v635 = vshll.u32 %v599, 16
        %v637 = vrot.slane %v635, 1
        %v638 = vsel %vm614, %v633, %v637
        %v640 = vshrl.u32 %v552, 16
        %v642 = vshll.u32 %v552, 16
        %v644 = vrot.slane %v642, 1
        %v645 = vor.u32 %v640, %v644
        %v647 = vshll.u32 %v600, 16
        %v649 = vrot.slane %v647, 1
        %v650 = vsel %vm614, %v645, %v649
        %v652 = vshrl.u32 %v553, 16
        %v654 = vshll.u32 %v553, 16
        %v656 = vrot.slane %v654, 1
        %v657 = vor.u32 %v652, %v656
        %v659 = vshll.u32 %v601, 16
        %v661 = vrot.slane %v659, 1
        %v662 = vsel %vm614, %v657, %v661
        %v664 = vshrl.u32 %v554, 16
        %v666 = vshll.u32 %v554, 16
        %v668 = vrot.slane %v666, 1
        %v669 = vor.u32 %v664, %v668
        %v671 = vshll.u32 %v602, 16
        %v673 = vrot.slane %v671, 1
        %v674 = vsel %vm614, %v669, %v673
        %v676 = vshrl.u32 %v555, 16
        %v678 = vshll.u32 %v555, 16
        %v680 = vrot.slane %v678, 1
        %v681 = vor.u32 %v676, %v680
        %v683 = vshll.u32 %v603, 16
        %v685 = vrot.slane %v683, 1
        %v686 = vsel %vm614, %v681, %v685
        %v688 = vshrl.u32 %v556, 16
        %v690 = vshll.u32 %v556, 16
        %v692 = vrot.slane %v690, 1
        %v693 = vor.u32 %v688, %v692
        %v695 = vshll.u32 %v604, 16
        %v697 = vrot.slane %v695, 1
        %v698 = vsel %vm614, %v693, %v697
        %v700 = vshrl.u32 %v557, 16
        %v702 = vshll.u32 %v557, 16
        %v704 = vrot.slane %v702, 1
        %v705 = vor.u32 %v700, %v704
        %v707 = vshll.u32 %v605, 16
        %v709 = vrot.slane %v707, 1
        %v710 = vsel %vm614, %v705, %v709
        %v712 = vshrl.u32 %v558, 16
        %v714 = vshll.u32 %v558, 16
        %v716 = vrot.slane %v714, 1
        %v717 = vor.u32 %v712, %v716
        %v719 = vshll.u32 %v606, 16
        %v721 = vrot.slane %v719, 1
        %v722 = vsel %vm614, %v717, %v721
        %v724 = vshrl.u32 %v559, 16
        %v726 = vshll.u32 %v559, 16
        %v728 = vrot.slane %v726, 1
        %v729 = vor.u32 %v724, %v728
        %v731 = vshll.u32 %v607, 16
        %v733 = vrot.slane %v731, 1
        %v734 = vsel %vm614, %v729, %v733
        %v736 = vshrl.u32 %v560, 16
        %v738 = vshll.u32 %v560, 16
        %v740 = vrot.slane %v738, 1
        %v741 = vor.u32 %v736, %v740
        %v743 = vshll.u32 %v608, 16
        %v745 = vrot.slane %v743, 1
        %v746 = vsel %vm614, %v741, %v745
        %v748 = vshrl.u32 %v561, 16
        %v750 = vshll.u32 %v561, 16
        %v752 = vrot.slane %v750, 1
        %v753 = vor.u32 %v748, %v752
        %v755 = vshll.u32 %v609, 16
        %v757 = vrot.slane %v755, 1
        %v758 = vsel %vm614, %v753, %v757
        %v760 = vshrl.u32 %v562, 16
        %v762 = vshll.u32 %v562, 16
        %v764 = vrot.slane %v762, 1
        %v765 = vor.u32 %v760, %v764
        %v767 = vshll.u32 %v610, 16
        %v769 = vrot.slane %v767, 1
        %v770 = vsel %vm614, %v765, %v769
        %v772 = vshrl.u32 %v563, 16
        %v774 = vshll.u32 %v563, 16
        %v776 = vrot.slane %v774, 1
        %v777 = vor.u32 %v772, %v776
        %v779 = vshll.u32 %v611, 16
        %v781 = vrot.slane %v779, 1
        %v782 = vsel %vm614, %v777, %v781
        %v784 = vshrl.u32 %v564, 16
        %v786 = vshll.u32 %v564, 16
        %v788 = vrot.slane %v786, 1
        %v789 = vor.u32 %v784, %v788
        %v791 = vshll.u32 %v612, 16
        %v793 = vrot.slane %v791, 1
        %v794 = vsel %vm614, %v789, %v793
        %v796 = vshrl.u32 %v565, 16
        %v798 = vshll.u32 %v565, 16
        %v800 = vrot.slane %v798, 1
        %v801 = vor.u32 %v796, %v800
        %v803 = vshll.u32 %v613, 16
        %v805 = vrot.slane %v803, 1
        %v806 = vsel %vm614, %v801, %v805
        %807 = vrot.lane.b32.xlu0 %v626, 4
        %v808 = vpop.permute.xlu0 %807
        %809 = vrot.lane.b32.xlu0 %v638, 4
        %v810 = vpop.permute.xlu0 %809
        %811 = vrot.lane.b32.xlu0 %v650, 4
        %v812 = vpop.permute.xlu0 %811
        %813 = vrot.lane.b32.xlu0 %v662, 4
        %v814 = vpop.permute.xlu0 %813
        %815 = vrot.lane.b32.xlu0 %v674, 4
        %v816 = vpop.permute.xlu0 %815
        %817 = vrot.lane.b32.xlu0 %v686, 4
        %v818 = vpop.permute.xlu0 %817
        %819 = vrot.lane.b32.xlu0 %v698, 4
        %v820 = vpop.permute.xlu0 %819
        %821 = vrot.lane.b32.xlu0 %v710, 4
        %v822 = vpop.permute.xlu0 %821
        %823 = vrot.lane.b32.xlu0 %v722, 4
        %v824 = vpop.permute.xlu0 %823
        %825 = vrot.lane.b32.xlu0 %v734, 4
        %v826 = vpop.permute.xlu0 %825
        %827 = vrot.lane.b32.xlu0 %v746, 4
        %v828 = vpop.permute.xlu0 %827
        %829 = vrot.lane.b32.xlu0 %v758, 4
        %v830 = vpop.permute.xlu0 %829
        %831 = vrot.lane.b32.xlu0 %v770, 4
        %v832 = vpop.permute.xlu0 %831
        %833 = vrot.lane.b32.xlu0 %v782, 4
        %v834 = vpop.permute.xlu0 %833
        %835 = vrot.lane.b32.xlu0 %v794, 4
        %v836 = vpop.permute.xlu0 %835
        %837 = vrot.lane.b32.xlu0 %v806, 4
        %v838 = vpop.permute.xlu0 %837
        %v855 = vunpack.c.l.b16 %v340
        %v856 = vunpack.c.l.b16 %v341
        %v857 = vunpack.c.l.b16 %v342
        %v858 = vunpack.c.l.b16 %v343
        %v859 = vunpack.c.l.b16 %v344
        %v860 = vunpack.c.l.b16 %v345
        %v861 = vunpack.c.l.b16 %v346
        %v862 = vunpack.c.l.b16 %v347
        %v863 = vunpack.c.l.b16 %v348
        %v864 = vunpack.c.l.b16 %v349
        %v865 = vunpack.c.l.b16 %v350
        %v866 = vunpack.c.l.b16 %v351
        %v867 = vunpack.c.l.b16 %v352
        %v868 = vunpack.c.l.b16 %v353
        %v869 = vunpack.c.l.b16 %v354
        %v870 = vunpack.c.l.b16 %v355
        %v871 = vpack.c.b16 %v519, %v855
        %v872 = vpack.c.b16 %v521, %v856
        %v873 = vpack.c.b16 %v523, %v857
        %v874 = vpack.c.b16 %v525, %v858
        %v875 = vpack.c.b16 %v527, %v859
        %v876 = vpack.c.b16 %v529, %v860
        %v877 = vpack.c.b16 %v531, %v861
        %v878 = vpack.c.b16 %v533, %v862
        %v879 = vpack.c.b16 %v535, %v863
        %v880 = vpack.c.b16 %v537, %v864
        %v881 = vpack.c.b16 %v539, %v865
        %v882 = vpack.c.b16 %v541, %v866
        %v883 = vpack.c.b16 %v543, %v867
        %v884 = vpack.c.b16 %v545, %v868
        %v885 = vpack.c.b16 %v547, %v869
        %v886 = vpack.c.b16 %v549, %v870
        %vm887 = vcmask 1046528
        %v888 = vrot.slane %v871, 1
        %v889 = vrot.slane %v598, 1
        %v890 = vsel %vm887, %v888, %v889
        %v891 = vrot.slane %v872, 1
        %v892 = vrot.slane %v599, 1
        %v893 = vsel %vm887, %v891, %v892
        %v894 = vrot.slane %v873, 1
        %v895 = vrot.slane %v600, 1
        %v896 = vsel %vm887, %v894, %v895
        %v897 = vrot.slane %v874, 1
        %v898 = vrot.slane %v601, 1
        %v899 = vsel %vm887, %v897, %v898
        %v900 = vrot.slane %v875, 1
        %v901 = vrot.slane %v602, 1
        %v902 = vsel %vm887, %v900, %v901
        %v903 = vrot.slane %v876, 1
        %v904 = vrot.slane %v603, 1
        %v905 = vsel %vm887, %v903, %v904
        %v906 = vrot.slane %v877, 1
        %v907 = vrot.slane %v604, 1
        %v908 = vsel %vm887, %v906, %v907
        %v909 = vrot.slane %v878, 1
        %v910 = vrot.slane %v605, 1
        %v911 = vsel %vm887, %v909, %v910
        %v912 = vrot.slane %v879, 1
        %v913 = vrot.slane %v606, 1
        %v914 = vsel %vm887, %v912, %v913
        %v915 = vrot.slane %v880, 1
        %v916 = vrot.slane %v607, 1
        %v917 = vsel %vm887, %v915, %v916
        %v918 = vrot.slane %v881, 1
        %v919 = vrot.slane %v608, 1
        %v920 = vsel %vm887, %v918, %v919
        %v921 = vrot.slane %v882, 1
        %v922 = vrot.slane %v609, 1
        %v923 = vsel %vm887, %v921, %v922
        %v924 = vrot.slane %v883, 1
        %v925 = vrot.slane %v610, 1
        %v926 = vsel %vm887, %v924, %v925
        %v927 = vrot.slane %v884, 1
        %v928 = vrot.slane %v611, 1
        %v929 = vsel %vm887, %v927, %v928
        %v930 = vrot.slane %v885, 1
        %v931 = vrot.slane %v612, 1
        %v932 = vsel %vm887, %v930, %v931
        %v933 = vrot.slane %v886, 1
        %v934 = vrot.slane %v613, 1
        %v935 = vsel %vm887, %v933, %v934
        %936 = vrot.lane.b32.xlu0 %v890, 8
        %v937 = vpop.permute.xlu0 %936
        %938 = vrot.lane.b32.xlu0 %v893, 8
        %v939 = vpop.permute.xlu0 %938
        %940 = vrot.lane.b32.xlu0 %v896, 8
        %v941 = vpop.permute.xlu0 %940
        %942 = vrot.lane.b32.xlu0 %v899, 8
        %v943 = vpop.permute.xlu0 %942
        %944 = vrot.lane.b32.xlu0 %v902, 8
        %v945 = vpop.permute.xlu0 %944
        %946 = vrot.lane.b32.xlu0 %v905, 8
        %v947 = vpop.permute.xlu0 %946
        %948 = vrot.lane.b32.xlu0 %v908, 8
        %v949 = vpop.permute.xlu0 %948
        %950 = vrot.lane.b32.xlu0 %v911, 8
        %v951 = vpop.permute.xlu0 %950
        %952 = vrot.lane.b32.xlu0 %v914, 8
        %v953 = vpop.permute.xlu0 %952
        %954 = vrot.lane.b32.xlu0 %v917, 8
        %v955 = vpop.permute.xlu0 %954
        %956 = vrot.lane.b32.xlu0 %v920, 8
        %v957 = vpop.permute.xlu0 %956
        %958 = vrot.lane.b32.xlu0 %v923, 8
        %v959 = vpop.permute.xlu0 %958
        %960 = vrot.lane.b32.xlu0 %v926, 8
        %v961 = vpop.permute.xlu0 %960
        %962 = vrot.lane.b32.xlu0 %v929, 8
        %v963 = vpop.permute.xlu0 %962
        %964 = vrot.lane.b32.xlu0 %v932, 8
        %v965 = vpop.permute.xlu0 %964
        %966 = vrot.lane.b32.xlu0 %v935, 8
        %v967 = vpop.permute.xlu0 %966
        %v1000 = vunpack.c.l.b16 %v357
        %v1001 = vunpack.c.l.b16 %v358
        %v1002 = vunpack.c.l.b16 %v359
        %v1003 = vunpack.c.l.b16 %v360
        %v1004 = vunpack.c.l.b16 %v361
        %v1005 = vunpack.c.l.b16 %v362
        %v1006 = vunpack.c.l.b16 %v363
        %v1007 = vunpack.c.l.b16 %v364
        %v1008 = vunpack.c.l.b16 %v365
        %v1009 = vunpack.c.l.b16 %v366
        %v1010 = vunpack.c.l.b16 %v367
        %v1011 = vunpack.c.l.b16 %v368
        %v1012 = vunpack.c.l.b16 %v369
        %v1013 = vunpack.c.l.b16 %v370
        %v1014 = vunpack.c.l.b16 %v371
        %v1015 = vunpack.c.l.b16 %v372
        %v1016 = vunpack.c.l.b16 %v373
        %v1017 = vunpack.c.l.b16 %v374
        %v1018 = vunpack.c.l.b16 %v375
        %v1019 = vunpack.c.l.b16 %v376
        %v1020 = vunpack.c.l.b16 %v377
        %v1021 = vunpack.c.l.b16 %v378
        %v1022 = vunpack.c.l.b16 %v379
        %v1023 = vunpack.c.l.b16 %v380
        %v1024 = vunpack.c.l.b16 %v381
        %v1025 = vunpack.c.l.b16 %v382
        %v1026 = vunpack.c.l.b16 %v383
        %v1027 = vunpack.c.l.b16 %v384
        %v1028 = vunpack.c.l.b16 %v385
        %v1029 = vunpack.c.l.b16 %v386
        %v1030 = vunpack.c.l.b16 %v387
        %v1031 = vunpack.c.l.b16 %v388
        %v1032 = vpack.c.b16 %v1001, %v1000
        %v1033 = vpack.c.b16 %v1003, %v1002
        %v1034 = vpack.c.b16 %v1005, %v1004
        %v1035 = vpack.c.b16 %v1007, %v1006
        %v1036 = vpack.c.b16 %v1009, %v1008
        %v1037 = vpack.c.b16 %v1011, %v1010
        %v1038 = vpack.c.b16 %v1013, %v1012
        %v1039 = vpack.c.b16 %v1015, %v1014
        %v1040 = vpack.c.b16 %v1017, %v1016
        %v1041 = vpack.c.b16 %v1019, %v1018
        %v1042 = vpack.c.b16 %v1021, %v1020
        %v1043 = vpack.c.b16 %v1023, %v1022
        %v1044 = vpack.c.b16 %v1025, %v1024
        %v1045 = vpack.c.b16 %v1027, %v1026
        %v1046 = vpack.c.b16 %v1029, %v1028
        %v1047 = vpack.c.b16 %v1031, %v1030
        %1048 = vrot.lane.b32.xlu0 %v1032, 12
        %v1049 = vpop.permute.xlu0 %1048
        %1050 = vrot.lane.b32.xlu0 %v1033, 12
        %v1051 = vpop.permute.xlu0 %1050
        %1052 = vrot.lane.b32.xlu0 %v1034, 12
        %v1053 = vpop.permute.xlu0 %1052
        %1054 = vrot.lane.b32.xlu0 %v1035, 12
        %v1055 = vpop.permute.xlu0 %1054
        %1056 = vrot.lane.b32.xlu0 %v1036, 12
        %v1057 = vpop.permute.xlu0 %1056
        %1058 = vrot.lane.b32.xlu0 %v1037, 12
        %v1059 = vpop.permute.xlu0 %1058
        %1060 = vrot.lane.b32.xlu0 %v1038, 12
        %v1061 = vpop.permute.xlu0 %1060
        %1062 = vrot.lane.b32.xlu0 %v1039, 12
        %v1063 = vpop.permute.xlu0 %1062
        %1064 = vrot.lane.b32.xlu0 %v1040, 12
        %v1065 = vpop.permute.xlu0 %1064
        %1066 = vrot.lane.b32.xlu0 %v1041, 12
        %v1067 = vpop.permute.xlu0 %1066
        %1068 = vrot.lane.b32.xlu0 %v1042, 12
        %v1069 = vpop.permute.xlu0 %1068
        %1070 = vrot.lane.b32.xlu0 %v1043, 12
        %v1071 = vpop.permute.xlu0 %1070
        %1072 = vrot.lane.b32.xlu0 %v1044, 12
        %v1073 = vpop.permute.xlu0 %1072
        %1074 = vrot.lane.b32.xlu0 %v1045, 12
        %v1075 = vpop.permute.xlu0 %1074
        %1076 = vrot.lane.b32.xlu0 %v1046, 12
        %v1077 = vpop.permute.xlu0 %1076
        %1078 = vrot.lane.b32.xlu0 %v1047, 12
        %v1079 = vpop.permute.xlu0 %1078
        %v1096 = vunpack.c.l.b16 %v389
        %v1097 = vunpack.c.l.b16 %v390
        %v1098 = vunpack.c.l.b16 %v391
        %v1099 = vunpack.c.l.b16 %v392
        %v1100 = vunpack.c.l.b16 %v393
        %v1101 = vunpack.c.l.b16 %v394
        %v1102 = vunpack.c.l.b16 %v395
        %v1103 = vunpack.c.l.b16 %v396
        %v1104 = vunpack.c.l.b16 %v397
        %v1105 = vunpack.c.l.b16 %v398
        %v1106 = vunpack.c.l.b16 %v399
        %v1107 = vunpack.c.l.b16 %v400
        %v1108 = vunpack.c.l.b16 %v401
        %v1109 = vunpack.c.l.b16 %v402
        %v1110 = vunpack.c.l.b16 %v403
        %v1111 = vunpack.c.l.b16 %v404
        %v1112 = vpack.c.b16 %v1096, %v1096
        %v1113 = vpack.c.b16 %v1097, %v1097
        %v1114 = vpack.c.b16 %v1098, %v1098
        %v1115 = vpack.c.b16 %v1099, %v1099
        %v1116 = vpack.c.b16 %v1100, %v1100
        %v1117 = vpack.c.b16 %v1101, %v1101
        %v1118 = vpack.c.b16 %v1102, %v1102
        %v1119 = vpack.c.b16 %v1103, %v1103
        %v1120 = vpack.c.b16 %v1104, %v1104
        %v1121 = vpack.c.b16 %v1105, %v1105
        %v1122 = vpack.c.b16 %v1106, %v1106
        %v1123 = vpack.c.b16 %v1107, %v1107
        %v1124 = vpack.c.b16 %v1108, %v1108
        %v1125 = vpack.c.b16 %v1109, %v1109
        %v1126 = vpack.c.b16 %v1110, %v1110
        %v1127 = vpack.c.b16 %v1111, %v1111
        %v1129 = vshrl.u32 %v1032, 16
        %v1131 = vshll.u32 %v1032, 16
        %v1133 = vrot.slane %v1131, 1
        %v1134 = vor.u32 %v1129, %v1133
        %v1136 = vshll.u32 %v1112, 16
        %v1138 = vrot.slane %v1136, 1
        %v1139 = vsel %vm614, %v1134, %v1138
        %v1141 = vshrl.u32 %v1033, 16
        %v1143 = vshll.u32 %v1033, 16
        %v1145 = vrot.slane %v1143, 1
        %v1146 = vor.u32 %v1141, %v1145
        %v1148 = vshll.u32 %v1113, 16
        %v1150 = vrot.slane %v1148, 1
        %v1151 = vsel %vm614, %v1146, %v1150
        %v1153 = vshrl.u32 %v1034, 16
        %v1155 = vshll.u32 %v1034, 16
        %v1157 = vrot.slane %v1155, 1
        %v1158 = vor.u32 %v1153, %v1157
        %v1160 = vshll.u32 %v1114, 16
        %v1162 = vrot.slane %v1160, 1
        %v1163 = vsel %vm614, %v1158, %v1162
        %v1165 = vshrl.u32 %v1035, 16
        %v1167 = vshll.u32 %v1035, 16
        %v1169 = vrot.slane %v1167, 1
        %v1170 = vor.u32 %v1165, %v1169
        %v1172 = vshll.u32 %v1115, 16
        %v1174 = vrot.slane %v1172, 1
        %v1175 = vsel %vm614, %v1170, %v1174
        %v1177 = vshrl.u32 %v1036, 16
        %v1179 = vshll.u32 %v1036, 16
        %v1181 = vrot.slane %v1179, 1
        %v1182 = vor.u32 %v1177, %v1181
        %v1184 = vshll.u32 %v1116, 16
        %v1186 = vrot.slane %v1184, 1
        %v1187 = vsel %vm614, %v1182, %v1186
        %v1189 = vshrl.u32 %v1037, 16
        %v1191 = vshll.u32 %v1037, 16
        %v1193 = vrot.slane %v1191, 1
        %v1194 = vor.u32 %v1189, %v1193
        %v1196 = vshll.u32 %v1117, 16
        %v1198 = vrot.slane %v1196, 1
        %v1199 = vsel %vm614, %v1194, %v1198
        %v1201 = vshrl.u32 %v1038, 16
        %v1203 = vshll.u32 %v1038, 16
        %v1205 = vrot.slane %v1203, 1
        %v1206 = vor.u32 %v1201, %v1205
        %v1208 = vshll.u32 %v1118, 16
        %v1210 = vrot.slane %v1208, 1
        %v1211 = vsel %vm614, %v1206, %v1210
        %v1213 = vshrl.u32 %v1039, 16
        %v1215 = vshll.u32 %v1039, 16
        %v1217 = vrot.slane %v1215, 1
        %v1218 = vor.u32 %v1213, %v1217
        %v1220 = vshll.u32 %v1119, 16
        %v1222 = vrot.slane %v1220, 1
        %v1223 = vsel %vm614, %v1218, %v1222
        %v1225 = vshrl.u32 %v1040, 16
        %v1227 = vshll.u32 %v1040, 16
        %v1229 = vrot.slane %v1227, 1
        %v1230 = vor.u32 %v1225, %v1229
        %v1232 = vshll.u32 %v1120, 16
        %v1234 = vrot.slane %v1232, 1
        %v1235 = vsel %vm614, %v1230, %v1234
        %v1237 = vshrl.u32 %v1041, 16
        %v1239 = vshll.u32 %v1041, 16
        %v1241 = vrot.slane %v1239, 1
        %v1242 = vor.u32 %v1237, %v1241
        %v1244 = vshll.u32 %v1121, 16
        %v1246 = vrot.slane %v1244, 1
        %v1247 = vsel %vm614, %v1242, %v1246
        %v1249 = vshrl.u32 %v1042, 16
        %v1251 = vshll.u32 %v1042, 16
        %v1253 = vrot.slane %v1251, 1
        %v1254 = vor.u32 %v1249, %v1253
        %v1256 = vshll.u32 %v1122, 16
        %v1258 = vrot.slane %v1256, 1
        %v1259 = vsel %vm614, %v1254, %v1258
        %v1261 = vshrl.u32 %v1043, 16
        %v1263 = vshll.u32 %v1043, 16
        %v1265 = vrot.slane %v1263, 1
        %v1266 = vor.u32 %v1261, %v1265
        %v1268 = vshll.u32 %v1123, 16
        %v1270 = vrot.slane %v1268, 1
        %v1271 = vsel %vm614, %v1266, %v1270
        %v1273 = vshrl.u32 %v1044, 16
        %v1275 = vshll.u32 %v1044, 16
        %v1277 = vrot.slane %v1275, 1
        %v1278 = vor.u32 %v1273, %v1277
        %v1280 = vshll.u32 %v1124, 16
        %v1282 = vrot.slane %v1280, 1
        %v1283 = vsel %vm614, %v1278, %v1282
        %v1285 = vshrl.u32 %v1045, 16
        %v1287 = vshll.u32 %v1045, 16
        %v1289 = vrot.slane %v1287, 1
        %v1290 = vor.u32 %v1285, %v1289
        %v1292 = vshll.u32 %v1125, 16
        %v1294 = vrot.slane %v1292, 1
        %v1295 = vsel %vm614, %v1290, %v1294
        %v1297 = vshrl.u32 %v1046, 16
        %v1299 = vshll.u32 %v1046, 16
        %v1301 = vrot.slane %v1299, 1
        %v1302 = vor.u32 %v1297, %v1301
        %v1304 = vshll.u32 %v1126, 16
        %v1306 = vrot.slane %v1304, 1
        %v1307 = vsel %vm614, %v1302, %v1306
        %v1309 = vshrl.u32 %v1047, 16
        %v1311 = vshll.u32 %v1047, 16
        %v1313 = vrot.slane %v1311, 1
        %v1314 = vor.u32 %v1309, %v1313
        %v1316 = vshll.u32 %v1127, 16
        %v1318 = vrot.slane %v1316, 1
        %v1319 = vsel %vm614, %v1314, %v1318
        %1320 = vrot.lane.b32.xlu0 %v1139, 16
        %v1321 = vpop.permute.xlu0 %1320
        %1322 = vrot.lane.b32.xlu0 %v1151, 16
        %v1323 = vpop.permute.xlu0 %1322
        %1324 = vrot.lane.b32.xlu0 %v1163, 16
        %v1325 = vpop.permute.xlu0 %1324
        %1326 = vrot.lane.b32.xlu0 %v1175, 16
        %v1327 = vpop.permute.xlu0 %1326
        %1328 = vrot.lane.b32.xlu0 %v1187, 16
        %v1329 = vpop.permute.xlu0 %1328
        %1330 = vrot.lane.b32.xlu0 %v1199, 16
        %v1331 = vpop.permute.xlu0 %1330
        %1332 = vrot.lane.b32.xlu0 %v1211, 16
        %v1333 = vpop.permute.xlu0 %1332
        %1334 = vrot.lane.b32.xlu0 %v1223, 16
        %v1335 = vpop.permute.xlu0 %1334
        %1336 = vrot.lane.b32.xlu0 %v1235, 16
        %v1337 = vpop.permute.xlu0 %1336
        %1338 = vrot.lane.b32.xlu0 %v1247, 16
        %v1339 = vpop.permute.xlu0 %1338
        %1340 = vrot.lane.b32.xlu0 %v1259, 16
        %v1341 = vpop.permute.xlu0 %1340
        %1342 = vrot.lane.b32.xlu0 %v1271, 16
        %v1343 = vpop.permute.xlu0 %1342
        %1344 = vrot.lane.b32.xlu0 %v1283, 16
        %v1345 = vpop.permute.xlu0 %1344
        %1346 = vrot.lane.b32.xlu0 %v1295, 16
        %v1347 = vpop.permute.xlu0 %1346
        %1348 = vrot.lane.b32.xlu0 %v1307, 16
        %v1349 = vpop.permute.xlu0 %1348
        %1350 = vrot.lane.b32.xlu0 %v1319, 16
        %v1351 = vpop.permute.xlu0 %1350
        %v1368 = vunpack.c.l.b16 %v405
        %v1369 = vunpack.c.l.b16 %v406
        %v1370 = vunpack.c.l.b16 %v407
        %v1371 = vunpack.c.l.b16 %v408
        %v1372 = vunpack.c.l.b16 %v409
        %v1373 = vunpack.c.l.b16 %v410
        %v1374 = vunpack.c.l.b16 %v411
        %v1375 = vunpack.c.l.b16 %v412
        %v1376 = vunpack.c.l.b16 %v413
        %v1377 = vunpack.c.l.b16 %v414
        %v1378 = vunpack.c.l.b16 %v415
        %v1379 = vunpack.c.l.b16 %v416
        %v1380 = vunpack.c.l.b16 %v417
        %v1381 = vunpack.c.l.b16 %v418
        %v1382 = vunpack.c.l.b16 %v419
        %v1383 = vunpack.c.l.b16 %v420
        %v1384 = vpack.c.b16 %v1001, %v1368
        %v1385 = vpack.c.b16 %v1003, %v1369
        %v1386 = vpack.c.b16 %v1005, %v1370
        %v1387 = vpack.c.b16 %v1007, %v1371
        %v1388 = vpack.c.b16 %v1009, %v1372
        %v1389 = vpack.c.b16 %v1011, %v1373
        %v1390 = vpack.c.b16 %v1013, %v1374
        %v1391 = vpack.c.b16 %v1015, %v1375
        %v1392 = vpack.c.b16 %v1017, %v1376
        %v1393 = vpack.c.b16 %v1019, %v1377
        %v1394 = vpack.c.b16 %v1021, %v1378
        %v1395 = vpack.c.b16 %v1023, %v1379
        %v1396 = vpack.c.b16 %v1025, %v1380
        %v1397 = vpack.c.b16 %v1027, %v1381
        %v1398 = vpack.c.b16 %v1029, %v1382
        %v1399 = vpack.c.b16 %v1031, %v1383
        %v1400 = vrot.slane %v1384, 1
        %v1401 = vrot.slane %v1112, 1
        %v1402 = vsel %vm887, %v1400, %v1401
        %v1403 = vrot.slane %v1385, 1
        %v1404 = vrot.slane %v1113, 1
        %v1405 = vsel %vm887, %v1403, %v1404
        %v1406 = vrot.slane %v1386, 1
        %v1407 = vrot.slane %v1114, 1
        %v1408 = vsel %vm887, %v1406, %v1407
        %v1409 = vrot.slane %v1387, 1
        %v1410 = vrot.slane %v1115, 1
        %v1411 = vsel %vm887, %v1409, %v1410
        %v1412 = vrot.slane %v1388, 1
        %v1413 = vrot.slane %v1116, 1
        %v1414 = vsel %vm887, %v1412, %v1413
        %v1415 = vrot.slane %v1389, 1
        %v1416 = vrot.slane %v1117, 1
        %v1417 = vsel %vm887, %v1415, %v1416
        %v1418 = vrot.slane %v1390, 1
        %v1419 = vrot.slane %v1118, 1
        %v1420 = vsel %vm887, %v1418, %v1419
        %v1421 = vrot.slane %v1391, 1
        %v1422 = vrot.slane %v1119, 1
        %v1423 = vsel %vm887, %v1421, %v1422
        %v1424 = vrot.slane %v1392, 1
        %v1425 = vrot.slane %v1120, 1
        %v1426 = vsel %vm887, %v1424, %v1425
        %v1427 = vrot.slane %v1393, 1
        %v1428 = vrot.slane %v1121, 1
        %v1429 = vsel %vm887, %v1427, %v1428
        %v1430 = vrot.slane %v1394, 1
        %v1431 = vrot.slane %v1122, 1
        %v1432 = vsel %vm887, %v1430, %v1431
        %v1433 = vrot.slane %v1395, 1
        %v1434 = vrot.slane %v1123, 1
        %v1435 = vsel %vm887, %v1433, %v1434
        %v1436 = vrot.slane %v1396, 1
        %v1437 = vrot.slane %v1124, 1
        %v1438 = vsel %vm887, %v1436, %v1437
        %v1439 = vrot.slane %v1397, 1
        %v1440 = vrot.slane %v1125, 1
        %v1441 = vsel %vm887, %v1439, %v1440
        %v1442 = vrot.slane %v1398, 1
        %v1443 = vrot.slane %v1126, 1
        %v1444 = vsel %vm887, %v1442, %v1443
        %v1445 = vrot.slane %v1399, 1
        %v1446 = vrot.slane %v1127, 1
        %v1447 = vsel %vm887, %v1445, %v1446
        %1448 = vrot.lane.b32.xlu0 %v1402, 20
        %v1449 = vpop.permute.xlu0 %1448
        %1450 = vrot.lane.b32.xlu0 %v1405, 20
        %v1451 = vpop.permute.xlu0 %1450
        %1452 = vrot.lane.b32.xlu0 %v1408, 20
        %v1453 = vpop.permute.xlu0 %1452
        %1454 = vrot.lane.b32.xlu0 %v1411, 20
        %v1455 = vpop.permute.xlu0 %1454
        %1456 = vrot.lane.b32.xlu0 %v1414, 20
        %v1457 = vpop.permute.xlu0 %1456
        %1458 = vrot.lane.b32.xlu0 %v1417, 20
        %v1459 = vpop.permute.xlu0 %1458
        %1460 = vrot.lane.b32.xlu0 %v1420, 20
        %v1461 = vpop.permute.xlu0 %1460
        %1462 = vrot.lane.b32.xlu0 %v1423, 20
        %v1463 = vpop.permute.xlu0 %1462
        %1464 = vrot.lane.b32.xlu0 %v1426, 20
        %v1465 = vpop.permute.xlu0 %1464
        %1466 = vrot.lane.b32.xlu0 %v1429, 20
        %v1467 = vpop.permute.xlu0 %1466
        %1468 = vrot.lane.b32.xlu0 %v1432, 20
        %v1469 = vpop.permute.xlu0 %1468
        %1470 = vrot.lane.b32.xlu0 %v1435, 20
        %v1471 = vpop.permute.xlu0 %1470
        %1472 = vrot.lane.b32.xlu0 %v1438, 20
        %v1473 = vpop.permute.xlu0 %1472
        %1474 = vrot.lane.b32.xlu0 %v1441, 20
        %v1475 = vpop.permute.xlu0 %1474
        %1476 = vrot.lane.b32.xlu0 %v1444, 20
        %v1477 = vpop.permute.xlu0 %1476
        %1478 = vrot.lane.b32.xlu0 %v1447, 20
        %v1479 = vpop.permute.xlu0 %1478
        %v1512 = vunpack.c.l.b16 %v422
        %v1513 = vunpack.c.l.b16 %v423
        %v1514 = vunpack.c.l.b16 %v424
        %v1515 = vunpack.c.l.b16 %v425
        %v1516 = vunpack.c.l.b16 %v426
        %v1517 = vunpack.c.l.b16 %v427
        %v1518 = vunpack.c.l.b16 %v428
        %v1519 = vunpack.c.l.b16 %v429
        %v1520 = vunpack.c.l.b16 %v430
        %v1521 = vunpack.c.l.b16 %v431
        %v1522 = vunpack.c.l.b16 %v432
        %v1523 = vunpack.c.l.b16 %v433
        %v1524 = vunpack.c.l.b16 %v434
        %v1525 = vunpack.c.l.b16 %v435
        %v1526 = vunpack.c.l.b16 %v436
        %v1527 = vunpack.c.l.b16 %v437
        %v1528 = vunpack.c.l.b16 %v438
        %v1529 = vunpack.c.l.b16 %v439
        %v1530 = vunpack.c.l.b16 %v440
        %v1531 = vunpack.c.l.b16 %v441
        %v1532 = vunpack.c.l.b16 %v442
        %v1533 = vunpack.c.l.b16 %v443
        %v1534 = vunpack.c.l.b16 %v444
        %v1535 = vunpack.c.l.b16 %v445
        %v1536 = vunpack.c.l.b16 %v446
        %v1537 = vunpack.c.l.b16 %v447
        %v1538 = vunpack.c.l.b16 %v448
        %v1539 = vunpack.c.l.b16 %v449
        %v1540 = vunpack.c.l.b16 %v450
        %v1541 = vunpack.c.l.b16 %v451
        %v1542 = vunpack.c.l.b16 %v452
        %v1543 = vunpack.c.l.b16 %v453
        %v1544 = vpack.c.b16 %v1513, %v1512
        %v1545 = vpack.c.b16 %v1515, %v1514
        %v1546 = vpack.c.b16 %v1517, %v1516
        %v1547 = vpack.c.b16 %v1519, %v1518
        %v1548 = vpack.c.b16 %v1521, %v1520
        %v1549 = vpack.c.b16 %v1523, %v1522
        %v1550 = vpack.c.b16 %v1525, %v1524
        %v1551 = vpack.c.b16 %v1527, %v1526
        %v1552 = vpack.c.b16 %v1529, %v1528
        %v1553 = vpack.c.b16 %v1531, %v1530
        %v1554 = vpack.c.b16 %v1533, %v1532
        %v1555 = vpack.c.b16 %v1535, %v1534
        %v1556 = vpack.c.b16 %v1537, %v1536
        %v1557 = vpack.c.b16 %v1539, %v1538
        %v1558 = vpack.c.b16 %v1541, %v1540
        %v1559 = vpack.c.b16 %v1543, %v1542
        %1560 = vrot.lane.b32.xlu0 %v1544, 24
        %v1561 = vpop.permute.xlu0 %1560
        %1562 = vrot.lane.b32.xlu0 %v1545, 24
        %v1563 = vpop.permute.xlu0 %1562
        %1564 = vrot.lane.b32.xlu0 %v1546, 24
        %v1565 = vpop.permute.xlu0 %1564
        %1566 = vrot.lane.b32.xlu0 %v1547, 24
        %v1567 = vpop.permute.xlu0 %1566
        %1568 = vrot.lane.b32.xlu0 %v1548, 24
        %v1569 = vpop.permute.xlu0 %1568
        %1570 = vrot.lane.b32.xlu0 %v1549, 24
        %v1571 = vpop.permute.xlu0 %1570
        %1572 = vrot.lane.b32.xlu0 %v1550, 24
        %v1573 = vpop.permute.xlu0 %1572
        %1574 = vrot.lane.b32.xlu0 %v1551, 24
        %v1575 = vpop.permute.xlu0 %1574
        %1576 = vrot.lane.b32.xlu0 %v1552, 24
        %v1577 = vpop.permute.xlu0 %1576
        %1578 = vrot.lane.b32.xlu0 %v1553, 24
        %v1579 = vpop.permute.xlu0 %1578
        %1580 = vrot.lane.b32.xlu0 %v1554, 24
        %v1581 = vpop.permute.xlu0 %1580
        %1582 = vrot.lane.b32.xlu0 %v1555, 24
        %v1583 = vpop.permute.xlu0 %1582
        %1584 = vrot.lane.b32.xlu0 %v1556, 24
        %v1585 = vpop.permute.xlu0 %1584
        %1586 = vrot.lane.b32.xlu0 %v1557, 24
        %v1587 = vpop.permute.xlu0 %1586
        %1588 = vrot.lane.b32.xlu0 %v1558, 24
        %v1589 = vpop.permute.xlu0 %1588
        %1590 = vrot.lane.b32.xlu0 %v1559, 24
        %v1591 = vpop.permute.xlu0 %1590
        %v1608 = vunpack.c.l.b16 %v454
        %v1609 = vunpack.c.l.b16 %v455
        %v1610 = vunpack.c.l.b16 %v456
        %v1611 = vunpack.c.l.b16 %v457
        %v1612 = vunpack.c.l.b16 %v458
        %v1613 = vunpack.c.l.b16 %v459
        %v1614 = vunpack.c.l.b16 %v460
        %v1615 = vunpack.c.l.b16 %v461
        %v1616 = vunpack.c.l.b16 %v462
        %v1617 = vunpack.c.l.b16 %v463
        %v1618 = vunpack.c.l.b16 %v464
        %v1619 = vunpack.c.l.b16 %v465
        %v1620 = vunpack.c.l.b16 %v466
        %v1621 = vunpack.c.l.b16 %v467
        %v1622 = vunpack.c.l.b16 %v468
        %v1623 = vunpack.c.l.b16 %v469
        %v1624 = vpack.c.b16 %v1608, %v1608
        %v1625 = vpack.c.b16 %v1609, %v1609
        %v1626 = vpack.c.b16 %v1610, %v1610
        %v1627 = vpack.c.b16 %v1611, %v1611
        %v1628 = vpack.c.b16 %v1612, %v1612
        %v1629 = vpack.c.b16 %v1613, %v1613
        %v1630 = vpack.c.b16 %v1614, %v1614
        %v1631 = vpack.c.b16 %v1615, %v1615
        %v1632 = vpack.c.b16 %v1616, %v1616
        %v1633 = vpack.c.b16 %v1617, %v1617
        %v1634 = vpack.c.b16 %v1618, %v1618
        %v1635 = vpack.c.b16 %v1619, %v1619
        %v1636 = vpack.c.b16 %v1620, %v1620
        %v1637 = vpack.c.b16 %v1621, %v1621
        %v1638 = vpack.c.b16 %v1622, %v1622
        %v1639 = vpack.c.b16 %v1623, %v1623
        %v1641 = vshrl.u32 %v1544, 16
        %v1643 = vshll.u32 %v1544, 16
        %v1645 = vrot.slane %v1643, 1
        %v1646 = vor.u32 %v1641, %v1645
        %v1648 = vshll.u32 %v1624, 16
        %v1650 = vrot.slane %v1648, 1
        %v1651 = vsel %vm614, %v1646, %v1650
        %v1653 = vshrl.u32 %v1545, 16
        %v1655 = vshll.u32 %v1545, 16
        %v1657 = vrot.slane %v1655, 1
        %v1658 = vor.u32 %v1653, %v1657
        %v1660 = vshll.u32 %v1625, 16
        %v1662 = vrot.slane %v1660, 1
        %v1663 = vsel %vm614, %v1658, %v1662
        %v1665 = vshrl.u32 %v1546, 16
        %v1667 = vshll.u32 %v1546, 16
        %v1669 = vrot.slane %v1667, 1
        %v1670 = vor.u32 %v1665, %v1669
        %v1672 = vshll.u32 %v1626, 16
        %v1674 = vrot.slane %v1672, 1
        %v1675 = vsel %vm614, %v1670, %v1674
        %v1677 = vshrl.u32 %v1547, 16
        %v1679 = vshll.u32 %v1547, 16
        %v1681 = vrot.slane %v1679, 1
        %v1682 = vor.u32 %v1677, %v1681
        %v1684 = vshll.u32 %v1627, 16
        %v1686 = vrot.slane %v1684, 1
        %v1687 = vsel %vm614, %v1682, %v1686
        %v1689 = vshrl.u32 %v1548, 16
        %v1691 = vshll.u32 %v1548, 16
        %v1693 = vrot.slane %v1691, 1
        %v1694 = vor.u32 %v1689, %v1693
        %v1696 = vshll.u32 %v1628, 16
        %v1698 = vrot.slane %v1696, 1
        %v1699 = vsel %vm614, %v1694, %v1698
        %v1701 = vshrl.u32 %v1549, 16
        %v1703 = vshll.u32 %v1549, 16
        %v1705 = vrot.slane %v1703, 1
        %v1706 = vor.u32 %v1701, %v1705
        %v1708 = vshll.u32 %v1629, 16
        %v1710 = vrot.slane %v1708, 1
        %v1711 = vsel %vm614, %v1706, %v1710
        %v1713 = vshrl.u32 %v1550, 16
        %v1715 = vshll.u32 %v1550, 16
        %v1717 = vrot.slane %v1715, 1
        %v1718 = vor.u32 %v1713, %v1717
        %v1720 = vshll.u32 %v1630, 16
        %v1722 = vrot.slane %v1720, 1
        %v1723 = vsel %vm614, %v1718, %v1722
        %v1725 = vshrl.u32 %v1551, 16
        %v1727 = vshll.u32 %v1551, 16
        %v1729 = vrot.slane %v1727, 1
        %v1730 = vor.u32 %v1725, %v1729
        %v1732 = vshll.u32 %v1631, 16
        %v1734 = vrot.slane %v1732, 1
        %v1735 = vsel %vm614, %v1730, %v1734
        %v1737 = vshrl.u32 %v1552, 16
        %v1739 = vshll.u32 %v1552, 16
        %v1741 = vrot.slane %v1739, 1
        %v1742 = vor.u32 %v1737, %v1741
        %v1744 = vshll.u32 %v1632, 16
        %v1746 = vrot.slane %v1744, 1
        %v1747 = vsel %vm614, %v1742, %v1746
        %v1749 = vshrl.u32 %v1553, 16
        %v1751 = vshll.u32 %v1553, 16
        %v1753 = vrot.slane %v1751, 1
        %v1754 = vor.u32 %v1749, %v1753
        %v1756 = vshll.u32 %v1633, 16
        %v1758 = vrot.slane %v1756, 1
        %v1759 = vsel %vm614, %v1754, %v1758
        %v1761 = vshrl.u32 %v1554, 16
        %v1763 = vshll.u32 %v1554, 16
        %v1765 = vrot.slane %v1763, 1
        %v1766 = vor.u32 %v1761, %v1765
        %v1768 = vshll.u32 %v1634, 16
        %v1770 = vrot.slane %v1768, 1
        %v1771 = vsel %vm614, %v1766, %v1770
        %v1773 = vshrl.u32 %v1555, 16
        %v1775 = vshll.u32 %v1555, 16
        %v1777 = vrot.slane %v1775, 1
        %v1778 = vor.u32 %v1773, %v1777
        %v1780 = vshll.u32 %v1635, 16
        %v1782 = vrot.slane %v1780, 1
        %v1783 = vsel %vm614, %v1778, %v1782
        %v1785 = vshrl.u32 %v1556, 16
        %v1787 = vshll.u32 %v1556, 16
        %v1789 = vrot.slane %v1787, 1
        %v1790 = vor.u32 %v1785, %v1789
        %v1792 = vshll.u32 %v1636, 16
        %v1794 = vrot.slane %v1792, 1
        %v1795 = vsel %vm614, %v1790, %v1794
        %v1797 = vshrl.u32 %v1557, 16
        %v1799 = vshll.u32 %v1557, 16
        %v1801 = vrot.slane %v1799, 1
        %v1802 = vor.u32 %v1797, %v1801
        %v1804 = vshll.u32 %v1637, 16
        %v1806 = vrot.slane %v1804, 1
        %v1807 = vsel %vm614, %v1802, %v1806
        %v1809 = vshrl.u32 %v1558, 16
        %v1811 = vshll.u32 %v1558, 16
        %v1813 = vrot.slane %v1811, 1
        %v1814 = vor.u32 %v1809, %v1813
        %v1816 = vshll.u32 %v1638, 16
        %v1818 = vrot.slane %v1816, 1
        %v1819 = vsel %vm614, %v1814, %v1818
        %v1821 = vshrl.u32 %v1559, 16
        %v1823 = vshll.u32 %v1559, 16
        %v1825 = vrot.slane %v1823, 1
        %v1826 = vor.u32 %v1821, %v1825
        %v1828 = vshll.u32 %v1639, 16
        %v1830 = vrot.slane %v1828, 1
        %v1831 = vsel %vm614, %v1826, %v1830
        %1832 = vrot.lane.b32.xlu0 %v1651, 28
        %v1833 = vpop.permute.xlu0 %1832
        %1834 = vrot.lane.b32.xlu0 %v1663, 28
        %v1835 = vpop.permute.xlu0 %1834
        %1836 = vrot.lane.b32.xlu0 %v1675, 28
        %v1837 = vpop.permute.xlu0 %1836
        %1838 = vrot.lane.b32.xlu0 %v1687, 28
        %v1839 = vpop.permute.xlu0 %1838
        %1840 = vrot.lane.b32.xlu0 %v1699, 28
        %v1841 = vpop.permute.xlu0 %1840
        %1842 = vrot.lane.b32.xlu0 %v1711, 28
        %v1843 = vpop.permute.xlu0 %1842
        %1844 = vrot.lane.b32.xlu0 %v1723, 28
        %v1845 = vpop.permute.xlu0 %1844
        %1846 = vrot.lane.b32.xlu0 %v1735, 28
        %v1847 = vpop.permute.xlu0 %1846
        %1848 = vrot.lane.b32.xlu0 %v1747, 28
        %v1849 = vpop.permute.xlu0 %1848
        %1850 = vrot.lane.b32.xlu0 %v1759, 28
        %v1851 = vpop.permute.xlu0 %1850
        %1852 = vrot.lane.b32.xlu0 %v1771, 28
        %v1853 = vpop.permute.xlu0 %1852
        %1854 = vrot.lane.b32.xlu0 %v1783, 28
        %v1855 = vpop.permute.xlu0 %1854
        %1856 = vrot.lane.b32.xlu0 %v1795, 28
        %v1857 = vpop.permute.xlu0 %1856
        %1858 = vrot.lane.b32.xlu0 %v1807, 28
        %v1859 = vpop.permute.xlu0 %1858
        %1860 = vrot.lane.b32.xlu0 %v1819, 28
        %v1861 = vpop.permute.xlu0 %1860
        %1862 = vrot.lane.b32.xlu0 %v1831, 28
        %v1863 = vpop.permute.xlu0 %1862
        %v1880 = vunpack.c.l.b16 %v470
        %v1881 = vunpack.c.l.b16 %v471
        %v1882 = vunpack.c.l.b16 %v472
        %v1883 = vunpack.c.l.b16 %v473
        %v1884 = vunpack.c.l.b16 %v474
        %v1885 = vunpack.c.l.b16 %v475
        %v1886 = vunpack.c.l.b16 %v476
        %v1887 = vunpack.c.l.b16 %v477
        %v1888 = vunpack.c.l.b16 %v478
        %v1889 = vunpack.c.l.b16 %v479
        %v1890 = vunpack.c.l.b16 %v480
        %v1891 = vunpack.c.l.b16 %v481
        %v1892 = vunpack.c.l.b16 %v482
        %v1893 = vunpack.c.l.b16 %v483
        %v1894 = vunpack.c.l.b16 %v484
        %v1895 = vunpack.c.l.b16 %v485
        %v1896 = vpack.c.b16 %v1513, %v1880
        %v1897 = vpack.c.b16 %v1515, %v1881
        %v1898 = vpack.c.b16 %v1517, %v1882
        %v1899 = vpack.c.b16 %v1519, %v1883
        %v1900 = vpack.c.b16 %v1521, %v1884
        %v1901 = vpack.c.b16 %v1523, %v1885
        %v1902 = vpack.c.b16 %v1525, %v1886
        %v1903 = vpack.c.b16 %v1527, %v1887
        %v1904 = vpack.c.b16 %v1529, %v1888
        %v1905 = vpack.c.b16 %v1531, %v1889
        %v1906 = vpack.c.b16 %v1533, %v1890
        %v1907 = vpack.c.b16 %v1535, %v1891
        %v1908 = vpack.c.b16 %v1537, %v1892
        %v1909 = vpack.c.b16 %v1539, %v1893
        %v1910 = vpack.c.b16 %v1541, %v1894
        %v1911 = vpack.c.b16 %v1543, %v1895
        %v1912 = vrot.slane %v1896, 1
        %v1913 = vrot.slane %v1624, 1
        %v1914 = vsel %vm887, %v1912, %v1913
        %v1915 = vrot.slane %v1897, 1
        %v1916 = vrot.slane %v1625, 1
        %v1917 = vsel %vm887, %v1915, %v1916
        %v1918 = vrot.slane %v1898, 1
        %v1919 = vrot.slane %v1626, 1
        %v1920 = vsel %vm887, %v1918, %v1919
        %v1921 = vrot.slane %v1899, 1
        %v1922 = vrot.slane %v1627, 1
        %v1923 = vsel %vm887, %v1921, %v1922
        %v1924 = vrot.slane %v1900, 1
        %v1925 = vrot.slane %v1628, 1
        %v1926 = vsel %vm887, %v1924, %v1925
        %v1927 = vrot.slane %v1901, 1
        %v1928 = vrot.slane %v1629, 1
        %v1929 = vsel %vm887, %v1927, %v1928
        %v1930 = vrot.slane %v1902, 1
        %v1931 = vrot.slane %v1630, 1
        %v1932 = vsel %vm887, %v1930, %v1931
        %v1933 = vrot.slane %v1903, 1
        %v1934 = vrot.slane %v1631, 1
        %v1935 = vsel %vm887, %v1933, %v1934
        %v1936 = vrot.slane %v1904, 1
        %v1937 = vrot.slane %v1632, 1
        %v1938 = vsel %vm887, %v1936, %v1937
        %v1939 = vrot.slane %v1905, 1
        %v1940 = vrot.slane %v1633, 1
        %v1941 = vsel %vm887, %v1939, %v1940
        %v1942 = vrot.slane %v1906, 1
        %v1943 = vrot.slane %v1634, 1
        %v1944 = vsel %vm887, %v1942, %v1943
        %v1945 = vrot.slane %v1907, 1
        %v1946 = vrot.slane %v1635, 1
        %v1947 = vsel %vm887, %v1945, %v1946
        %v1948 = vrot.slane %v1908, 1
        %v1949 = vrot.slane %v1636, 1
        %v1950 = vsel %vm887, %v1948, %v1949
        %v1951 = vrot.slane %v1909, 1
        %v1952 = vrot.slane %v1637, 1
        %v1953 = vsel %vm887, %v1951, %v1952
        %v1954 = vrot.slane %v1910, 1
        %v1955 = vrot.slane %v1638, 1
        %v1956 = vsel %vm887, %v1954, %v1955
        %v1957 = vrot.slane %v1911, 1
        %v1958 = vrot.slane %v1639, 1
        %v1959 = vsel %vm887, %v1957, %v1958
        %1960 = vrot.lane.b32.xlu0 %v1914, 32
        %v1961 = vpop.permute.xlu0 %1960
        %1962 = vrot.lane.b32.xlu0 %v1917, 32
        %v1963 = vpop.permute.xlu0 %1962
        %1964 = vrot.lane.b32.xlu0 %v1920, 32
        %v1965 = vpop.permute.xlu0 %1964
        %1966 = vrot.lane.b32.xlu0 %v1923, 32
        %v1967 = vpop.permute.xlu0 %1966
        %1968 = vrot.lane.b32.xlu0 %v1926, 32
        %v1969 = vpop.permute.xlu0 %1968
        %1970 = vrot.lane.b32.xlu0 %v1929, 32
        %v1971 = vpop.permute.xlu0 %1970
        %1972 = vrot.lane.b32.xlu0 %v1932, 32
        %v1973 = vpop.permute.xlu0 %1972
        %1974 = vrot.lane.b32.xlu0 %v1935, 32
        %v1975 = vpop.permute.xlu0 %1974
        %1976 = vrot.lane.b32.xlu0 %v1938, 32
        %v1977 = vpop.permute.xlu0 %1976
        %1978 = vrot.lane.b32.xlu0 %v1941, 32
        %v1979 = vpop.permute.xlu0 %1978
        %1980 = vrot.lane.b32.xlu0 %v1944, 32
        %v1981 = vpop.permute.xlu0 %1980
        %1982 = vrot.lane.b32.xlu0 %v1947, 32
        %v1983 = vpop.permute.xlu0 %1982
        %1984 = vrot.lane.b32.xlu0 %v1950, 32
        %v1985 = vpop.permute.xlu0 %1984
        %1986 = vrot.lane.b32.xlu0 %v1953, 32
        %v1987 = vpop.permute.xlu0 %1986
        %1988 = vrot.lane.b32.xlu0 %v1956, 32
        %v1989 = vpop.permute.xlu0 %1988
        %1990 = vrot.lane.b32.xlu0 %v1959, 32
        %v1991 = vpop.permute.xlu0 %1990
        %vm1992 = vcmask 31744
        %v1994 = vsel %vm1992, %v550, %v808
        %v1996 = vsel %vm1992, %v551, %v810
        %v1998 = vsel %vm1992, %v552, %v812
        %v2000 = vsel %vm1992, %v553, %v814
        %v2002 = vsel %vm1992, %v554, %v816
        %v2004 = vsel %vm1992, %v555, %v818
        %v2006 = vsel %vm1992, %v556, %v820
        %v2008 = vsel %vm1992, %v557, %v822
        %v2010 = vsel %vm1992, %v558, %v824
        %v2012 = vsel %vm1992, %v559, %v826
        %v2014 = vsel %vm1992, %v560, %v828
        %v2016 = vsel %vm1992, %v561, %v830
        %v2018 = vsel %vm1992, %v562, %v832
        %v2020 = vsel %vm1992, %v563, %v834
        %v2022 = vsel %vm1992, %v564, %v836
        %v2024 = vsel %vm1992, %v565, %v838
        %vm2025 = vcmask 64512
        %v2027 = vsel %vm2025, %v1994, %v937
        %v2029 = vsel %vm2025, %v1996, %v939
        %v2031 = vsel %vm2025, %v1998, %v941
        %v2033 = vsel %vm2025, %v2000, %v943
        %v2035 = vsel %vm2025, %v2002, %v945
        %v2037 = vsel %vm2025, %v2004, %v947
        %v2039 = vsel %vm2025, %v2006, %v949
        %v2041 = vsel %vm2025, %v2008, %v951
        %v2043 = vsel %vm2025, %v2010, %v953
        %v2045 = vsel %vm2025, %v2012, %v955
        %v2047 = vsel %vm2025, %v2014, %v957
        %v2049 = vsel %vm2025, %v2016, %v959
        %v2051 = vsel %vm2025, %v2018, %v961
        %v2053 = vsel %vm2025, %v2020, %v963
        %v2055 = vsel %vm2025, %v2022, %v965
        %v2057 = vsel %vm2025, %v2024, %v967
        %vm2058 = vcmask 97280
        %v2060 = vsel %vm2058, %v2027, %v1049
        %v2062 = vsel %vm2058, %v2029, %v1051
        %v2064 = vsel %vm2058, %v2031, %v1053
        %v2066 = vsel %vm2058, %v2033, %v1055
        %v2068 = vsel %vm2058, %v2035, %v1057
        %v2070 = vsel %vm2058, %v2037, %v1059
        %v2072 = vsel %vm2058, %v2039, %v1061
        %v2074 = vsel %vm2058, %v2041, %v1063
        %v2076 = vsel %vm2058, %v2043, %v1065
        %v2078 = vsel %vm2058, %v2045, %v1067
        %v2080 = vsel %vm2058, %v2047, %v1069
        %v2082 = vsel %vm2058, %v2049, %v1071
        %v2084 = vsel %vm2058, %v2051, %v1073
        %v2086 = vsel %vm2058, %v2053, %v1075
        %v2088 = vsel %vm2058, %v2055, %v1077
        %v2090 = vsel %vm2058, %v2057, %v1079
        %vm2091 = vcmask 130048
        %v2093 = vsel %vm2091, %v2060, %v1321
        %v2095 = vsel %vm2091, %v2062, %v1323
        %v2097 = vsel %vm2091, %v2064, %v1325
        %v2099 = vsel %vm2091, %v2066, %v1327
        %v2101 = vsel %vm2091, %v2068, %v1329
        %v2103 = vsel %vm2091, %v2070, %v1331
        %v2105 = vsel %vm2091, %v2072, %v1333
        %v2107 = vsel %vm2091, %v2074, %v1335
        %v2109 = vsel %vm2091, %v2076, %v1337
        %v2111 = vsel %vm2091, %v2078, %v1339
        %v2113 = vsel %vm2091, %v2080, %v1341
        %v2115 = vsel %vm2091, %v2082, %v1343
        %v2117 = vsel %vm2091, %v2084, %v1345
        %v2119 = vsel %vm2091, %v2086, %v1347
        %v2121 = vsel %vm2091, %v2088, %v1349
        %v2123 = vsel %vm2091, %v2090, %v1351
        %vm2124 = vcmask 162816
        %v2126 = vsel %vm2124, %v2093, %v1449
        %v2128 = vsel %vm2124, %v2095, %v1451
        %v2130 = vsel %vm2124, %v2097, %v1453
        %v2132 = vsel %vm2124, %v2099, %v1455
        %v2134 = vsel %vm2124, %v2101, %v1457
        %v2136 = vsel %vm2124, %v2103, %v1459
        %v2138 = vsel %vm2124, %v2105, %v1461
        %v2140 = vsel %vm2124, %v2107, %v1463
        %v2142 = vsel %vm2124, %v2109, %v1465
        %v2144 = vsel %vm2124, %v2111, %v1467
        %v2146 = vsel %vm2124, %v2113, %v1469
        %v2148 = vsel %vm2124, %v2115, %v1471
        %v2150 = vsel %vm2124, %v2117, %v1473
        %v2152 = vsel %vm2124, %v2119, %v1475
        %v2154 = vsel %vm2124, %v2121, %v1477
        %v2156 = vsel %vm2124, %v2123, %v1479
        %vm2157 = vcmask 195584
        %v2159 = vsel %vm2157, %v2126, %v1561
        %v2161 = vsel %vm2157, %v2128, %v1563
        %v2163 = vsel %vm2157, %v2130, %v1565
        %v2165 = vsel %vm2157, %v2132, %v1567
        %v2167 = vsel %vm2157, %v2134, %v1569
        %v2169 = vsel %vm2157, %v2136, %v1571
        %v2171 = vsel %vm2157, %v2138, %v1573
        %v2173 = vsel %vm2157, %v2140, %v1575
        %v2175 = vsel %vm2157, %v2142, %v1577
        %v2177 = vsel %vm2157, %v2144, %v1579
        %v2179 = vsel %vm2157, %v2146, %v1581
        %v2181 = vsel %vm2157, %v2148, %v1583
        %v2183 = vsel %vm2157, %v2150, %v1585
        %v2185 = vsel %vm2157, %v2152, %v1587
        %v2187 = vsel %vm2157, %v2154, %v1589
        %v2189 = vsel %vm2157, %v2156, %v1591
        %vm2190 = vcmask 228352
        %v2192 = vsel %vm2190, %v2159, %v1833
        %v2194 = vsel %vm2190, %v2161, %v1835
        %v2196 = vsel %vm2190, %v2163, %v1837
        %v2198 = vsel %vm2190, %v2165, %v1839
        %v2200 = vsel %vm2190, %v2167, %v1841
        %v2202 = vsel %vm2190, %v2169, %v1843
        %v2204 = vsel %vm2190, %v2171, %v1845
        %v2206 = vsel %vm2190, %v2173, %v1847
        %v2208 = vsel %vm2190, %v2175, %v1849
        %v2210 = vsel %vm2190, %v2177, %v1851
        %v2212 = vsel %vm2190, %v2179, %v1853
        %v2214 = vsel %vm2190, %v2181, %v1855
        %v2216 = vsel %vm2190, %v2183, %v1857
        %v2218 = vsel %vm2190, %v2185, %v1859
        %v2220 = vsel %vm2190, %v2187, %v1861
        %v2222 = vsel %vm2190, %v2189, %v1863
        %vm2223 = vcmask 261120
        %v2225 = vsel %vm2223, %v2192, %v1961
        %v2227 = vsel %vm2223, %v2194, %v1963
        %v2229 = vsel %vm2223, %v2196, %v1965
        %v2231 = vsel %vm2223, %v2198, %v1967
        %v2233 = vsel %vm2223, %v2200, %v1969
        %v2235 = vsel %vm2223, %v2202, %v1971
        %v2237 = vsel %vm2223, %v2204, %v1973
        %v2239 = vsel %vm2223, %v2206, %v1975
        %v2241 = vsel %vm2223, %v2208, %v1977
        %v2243 = vsel %vm2223, %v2210, %v1979
        %v2245 = vsel %vm2223, %v2212, %v1981
        %v2247 = vsel %vm2223, %v2214, %v1983
        %v2249 = vsel %vm2223, %v2216, %v1985
        %v2251 = vsel %vm2223, %v2218, %v1987
        %v2253 = vsel %vm2223, %v2220, %v1989
        %v2255 = vsel %vm2223, %v2222, %v1991
        %v2256 = vld [vmem:[%s1] sm:$0xf]
        %v2257 = vld [vmem:[%s1 + $0x4] sm:$0xf]
        %v2258 = vld [vmem:[%s1 + $0x8] sm:$0xf]
        %v2259 = vld [vmem:[%s1 + $0xc] sm:$0xf]
        %v2260 = vld [vmem:[%s1 + $0x10] sm:$0x3]
        %v2261 = vld [vmem:[%s2] sm:$0x1]
        %v2263 = vperm.slane %v2261, 0
        %v2270 = vunpack.c.l.b16 %v2256
        %v2271 = vunpack.c.l.b16 %v2257
        %v2272 = vunpack.c.l.b16 %v2258
        %v2273 = vunpack.c.l.b16 %v2259
        %v2274 = vunpack.c.l.b16 %v2260
        %v2275 = vpack.c.b16 %v2271, %v2270
        %v2276 = vpack.c.b16 %v2273, %v2272
        %v2277 = vpack.c.b16 %v2274, %v2274
        %vm2280 = vcmask 293888
        %v2281 = vsel %vm2280, %v2225, 0
        %v2283 = vsel %vm2280, %v2227, 0
        %v2285 = vsel %vm2280, %v2229, 0
        %v2287 = vsel %vm2280, %v2231, 0
        %v2289 = vsel %vm2280, %v2233, 0
        %v2291 = vsel %vm2280, %v2235, 0
        %v2293 = vsel %vm2280, %v2237, 0
        %v2295 = vsel %vm2280, %v2239, 0
        %v2297 = vsel %vm2280, %v2241, 0
        %v2299 = vsel %vm2280, %v2243, 0
        %v2301 = vsel %vm2280, %v2245, 0
        %v2303 = vsel %vm2280, %v2247, 0
        %v2305 = vsel %vm2280, %v2249, 0
        %v2307 = vsel %vm2280, %v2251, 0
        %v2309 = vsel %vm2280, %v2253, 0
        %v2311 = vsel %vm2280, %v2255, 0
        %vm2313 = vcmask 1041408
        %v2315 = vsel %vm2313, %v2277, 0
        %2317 = vmatpush.bf16.msra.mxu0 0
        %2318 = vmatpush.bf16.msra.mxu0 0
        %2319 = vmatpush.bf16.msra.mxu0 0
        %2320 = vmatpush.bf16.msra.mxu0 0
        %2321 = vmatpush.bf16.msra.mxu0 0
        %2322 = vmatpush.bf16.msra.mxu0 %v2315
        %2323 = vmatpush.bf16.msra.mxu0 %v2276
        %2324 = vmatpush.bf16.msra.mxu0 %v2275
        %2325 = vmatmul.bf16.gmra.mxu0 %v2281
        %v2326 = vpop.f32.mrf.mxu0
        %v2327 = vadd.f32 %v2263, %v2326
        %v2328 = vpop.f32.mrf.mxu0
        %v2329 = vadd.f32 %v2263, %v2328
        %2330 = vmatmul.bf16.gmra.mxu0 %v2283
        %v2331 = vpop.f32.mrf.mxu0
        %v2332 = vadd.f32 %v2263, %v2331
        %v2333 = vpop.f32.mrf.mxu0
        %v2334 = vadd.f32 %v2263, %v2333
        %2335 = vmatmul.bf16.gmra.mxu0 %v2285
        %v2336 = vpop.f32.mrf.mxu0
        %v2337 = vadd.f32 %v2263, %v2336
        %v2338 = vpop.f32.mrf.mxu0
        %v2339 = vadd.f32 %v2263, %v2338
        %2340 = vmatmul.bf16.gmra.mxu0 %v2287
        %v2341 = vpop.f32.mrf.mxu0
        %v2342 = vadd.f32 %v2263, %v2341
        %v2343 = vpop.f32.mrf.mxu0
        %v2344 = vadd.f32 %v2263, %v2343
        %2345 = vmatmul.bf16.gmra.mxu0 %v2289
        %v2346 = vpop.f32.mrf.mxu0
        %v2347 = vadd.f32 %v2263, %v2346
        %v2348 = vpop.f32.mrf.mxu0
        %v2349 = vadd.f32 %v2263, %v2348
        %2350 = vmatmul.bf16.gmra.mxu0 %v2291
        %v2351 = vpop.f32.mrf.mxu0
        %v2352 = vadd.f32 %v2263, %v2351
        %v2353 = vpop.f32.mrf.mxu0
        %v2354 = vadd.f32 %v2263, %v2353
        %2355 = vmatmul.bf16.gmra.mxu0 %v2293
        %v2356 = vpop.f32.mrf.mxu0
        %v2357 = vadd.f32 %v2263, %v2356
        %v2358 = vpop.f32.mrf.mxu0
        %v2359 = vadd.f32 %v2263, %v2358
        %2360 = vmatmul.bf16.gmra.mxu0 %v2295
        %v2361 = vpop.f32.mrf.mxu0
        %v2362 = vadd.f32 %v2263, %v2361
        %v2363 = vpop.f32.mrf.mxu0
        %v2364 = vadd.f32 %v2263, %v2363
        %2365 = vmatmul.bf16.gmra.mxu0 %v2297
        %v2366 = vpop.f32.mrf.mxu0
        %v2367 = vadd.f32 %v2263, %v2366
        %v2368 = vpop.f32.mrf.mxu0
        %v2369 = vadd.f32 %v2263, %v2368
        %2370 = vmatmul.bf16.gmra.mxu0 %v2299
        %v2371 = vpop.f32.mrf.mxu0
        %v2372 = vadd.f32 %v2263, %v2371
        %v2373 = vpop.f32.mrf.mxu0
        %v2374 = vadd.f32 %v2263, %v2373
        %2375 = vmatmul.bf16.gmra.mxu0 %v2301
        %v2376 = vpop.f32.mrf.mxu0
        %v2377 = vadd.f32 %v2263, %v2376
        %v2378 = vpop.f32.mrf.mxu0
        %v2379 = vadd.f32 %v2263, %v2378
        %2380 = vmatmul.bf16.gmra.mxu0 %v2303
        %v2381 = vpop.f32.mrf.mxu0
        %v2382 = vadd.f32 %v2263, %v2381
        %v2383 = vpop.f32.mrf.mxu0
        %v2384 = vadd.f32 %v2263, %v2383
        %2385 = vmatmul.bf16.gmra.mxu0 %v2305
        %v2386 = vpop.f32.mrf.mxu0
        %v2387 = vadd.f32 %v2263, %v2386
        %v2388 = vpop.f32.mrf.mxu0
        %v2389 = vadd.f32 %v2263, %v2388
        %2390 = vmatmul.bf16.gmra.mxu0 %v2307
        %v2391 = vpop.f32.mrf.mxu0
        %v2392 = vadd.f32 %v2263, %v2391
        %v2393 = vpop.f32.mrf.mxu0
        %v2394 = vadd.f32 %v2263, %v2393
        %2395 = vmatmul.bf16.gmra.mxu0 %v2309
        %v2396 = vpop.f32.mrf.mxu0
        %v2397 = vadd.f32 %v2263, %v2396
        %v2398 = vpop.f32.mrf.mxu0
        %v2399 = vadd.f32 %v2263, %v2398
        %2400 = vmatmul.bf16.gmra.mxu0 %v2311
        %v2401 = vpop.f32.mrf.mxu0
        %v2402 = vadd.f32 %v2263, %v2401
        %v2403 = vpop.f32.mrf.mxu0
        %v2404 = vadd.f32 %v2263, %v2403
        %2405 = vdwg.mxu0
        %v2406 = vmax.f32 %v2327, 0.0
        %v2407 = vmax.f32 %v2329, 0.0
        %v2408 = vmax.f32 %v2332, 0.0
        %v2409 = vmax.f32 %v2334, 0.0
        %v2410 = vmax.f32 %v2337, 0.0
        %v2411 = vmax.f32 %v2339, 0.0
        %v2412 = vmax.f32 %v2342, 0.0
        %v2413 = vmax.f32 %v2344, 0.0
        %v2414 = vmax.f32 %v2347, 0.0
        %v2415 = vmax.f32 %v2349, 0.0
        %v2416 = vmax.f32 %v2352, 0.0
        %v2417 = vmax.f32 %v2354, 0.0
        %v2418 = vmax.f32 %v2357, 0.0
        %v2419 = vmax.f32 %v2359, 0.0
        %v2420 = vmax.f32 %v2362, 0.0
        %v2421 = vmax.f32 %v2364, 0.0
        %v2422 = vmax.f32 %v2367, 0.0
        %v2423 = vmax.f32 %v2369, 0.0
        %v2424 = vmax.f32 %v2372, 0.0
        %v2425 = vmax.f32 %v2374, 0.0
        %v2426 = vmax.f32 %v2377, 0.0
        %v2427 = vmax.f32 %v2379, 0.0
        %v2428 = vmax.f32 %v2382, 0.0
        %v2429 = vmax.f32 %v2384, 0.0
        %v2430 = vmax.f32 %v2387, 0.0
        %v2431 = vmax.f32 %v2389, 0.0
        %v2432 = vmax.f32 %v2392, 0.0
        %v2433 = vmax.f32 %v2394, 0.0
        %v2434 = vmax.f32 %v2397, 0.0
        %v2435 = vmax.f32 %v2399, 0.0
        %v2436 = vmax.f32 %v2402, 0.0
        %v2437 = vmax.f32 %v2404, 0.0
        %v2438 = vld [vmem:[%s275] sm:$0x1]
        %v2439 = vsel %vm2223, %v2406, 0.0
        %v2440 = vsel %vm2223, %v2407, 0.0
        %v2441 = vadd.f32 %v2439, %v2440
        %v2442 = vsel %vm2223, %v2408, 0.0
        %v2443 = vadd.f32 %v2441, %v2442
        %v2444 = vsel %vm2223, %v2409, 0.0
        %v2445 = vadd.f32 %v2443, %v2444
        %v2446 = vsel %vm2223, %v2410, 0.0
        %v2447 = vadd.f32 %v2445, %v2446
        %v2448 = vsel %vm2223, %v2411, 0.0
        %v2449 = vadd.f32 %v2447, %v2448
        %v2450 = vsel %vm2223, %v2412, 0.0
        %v2451 = vadd.f32 %v2449, %v2450
        %v2452 = vsel %vm2223, %v2413, 0.0
        %v2453 = vadd.f32 %v2451, %v2452
        %v2454 = vsel %vm2223, %v2414, 0.0
        %v2455 = vadd.f32 %v2453, %v2454
        %v2456 = vsel %vm2223, %v2415, 0.0
        %v2457 = vadd.f32 %v2455, %v2456
        %v2458 = vsel %vm2223, %v2416, 0.0
        %v2459 = vadd.f32 %v2457, %v2458
        %v2460 = vsel %vm2223, %v2417, 0.0
        %v2461 = vadd.f32 %v2459, %v2460
        %v2462 = vsel %vm2223, %v2418, 0.0
        %v2463 = vadd.f32 %v2461, %v2462
        %v2464 = vsel %vm2223, %v2419, 0.0
        %v2465 = vadd.f32 %v2463, %v2464
        %v2466 = vsel %vm2223, %v2420, 0.0
        %v2467 = vadd.f32 %v2465, %v2466
        %v2468 = vsel %vm2223, %v2421, 0.0
        %v2469 = vadd.f32 %v2467, %v2468
        %v2470 = vsel %vm2223, %v2422, 0.0
        %v2471 = vadd.f32 %v2469, %v2470
        %v2472 = vsel %vm2223, %v2423, 0.0
        %v2473 = vadd.f32 %v2471, %v2472
        %v2474 = vsel %vm2223, %v2424, 0.0
        %v2475 = vadd.f32 %v2473, %v2474
        %v2476 = vsel %vm2223, %v2425, 0.0
        %v2477 = vadd.f32 %v2475, %v2476
        %v2478 = vsel %vm2223, %v2426, 0.0
        %v2479 = vadd.f32 %v2477, %v2478
        %v2480 = vsel %vm2223, %v2427, 0.0
        %v2481 = vadd.f32 %v2479, %v2480
        %v2482 = vsel %vm2223, %v2428, 0.0
        %v2483 = vadd.f32 %v2481, %v2482
        %v2484 = vsel %vm2223, %v2429, 0.0
        %v2485 = vadd.f32 %v2483, %v2484
        %v2486 = vsel %vm2223, %v2430, 0.0
        %v2487 = vadd.f32 %v2485, %v2486
        %v2488 = vsel %vm2223, %v2431, 0.0
        %v2489 = vadd.f32 %v2487, %v2488
        %v2490 = vsel %vm2223, %v2432, 0.0
        %v2491 = vadd.f32 %v2489, %v2490
        %v2492 = vsel %vm2223, %v2433, 0.0
        %v2493 = vadd.f32 %v2491, %v2492
        %v2494 = vsel %vm2223, %v2434, 0.0
        %v2495 = vadd.f32 %v2493, %v2494
        %v2496 = vsel %vm2223, %v2435, 0.0
        %v2497 = vadd.f32 %v2495, %v2496
        %v2498 = vsel %vm2223, %v2436, 0.0
        %v2499 = vadd.f32 %v2497, %v2498
        %v2500 = vsel %vm2223, %v2437, 0.0
        %v2501 = vadd.f32 %v2499, %v2500
        %v2502 = vrot.slane %v2501, 4
        %v2503 = vadd.f32 %v2501, %v2502
        %v2504 = vrot.slane %v2503, 2
        %v2505 = vadd.f32 %v2503, %v2504
        %v2506 = vrot.slane %v2505, 1
        %v2507 = vadd.f32 %v2505, %v2506
        %v2508 = vadd.f32 %v2438, %v2507
        %vm2509 = vcmask 253952
        %2510 = vst.msk [vmem:[%s275] sm:$0x1] %vm2509, %v2508
        // Predicated region
        $region45: #{classifier_forward.1} parent=39 // pred_check
          %p2511 = pneg %p286
        $region46: #{classifier_forward.1} parent=39 // pred_check_branch
          %2513 = sbr.rel (%p2511) target = $region48
        $region47: #{classifier_forward.1} parent=39 // pred_region
          %v2514 = vld [vmem:[%s275] sm:$0x1]
          %v2515 = vmul.f32 %v2514, 0.00390625
          %2516 = vst.msk [vmem:[%s275] sm:$0x1] %vm2509, %v2515
          %v2517 = vld [vmem:[%s3] sm:$0xff]
          %v2518 = vld [vmem:[%s3 + $0x8] sm:$0xff]
          %v2519 = vld [vmem:[%s3 + $0x10] sm:$0xff]
          %v2520 = vld [vmem:[%s3 + $0x18] sm:$0xff]
          %v2521 = vld [vmem:[%s4] sm:$0x1]
          %v2523 = vsel %vm2223, %v2515, 0
          %2525 = vmatpush.msra.mxu0 0.0
          %2526 = vmatpush.msra.mxu0 0.0
          %2527 = vmatpush.msra.mxu0 0.0
          %2528 = vmatpush.msra.mxu0 0.0
          %2529 = vmatpush.msra.mxu0 0.0
          %2530 = vmatpush.msra.mxu0 0.0
          %2531 = vmatpush.msra.mxu0 0.0
          %2532 = vmatpush.msra.mxu0 0.0
          %2533 = vmatpush.msra.mxu0 0.0
          %2534 = vmatpush.msra.mxu0 0.0
          %2535 = vmatpush.msra.mxu0 0.0
          %2536 = vmatpush.msra.mxu0 0.0
          %2537 = vmatpush.msra.mxu0 %v2520
          %2538 = vmatpush.msra.mxu0 %v2519
          %2539 = vmatpush.msra.mxu0 %v2518
          %2540 = vmatpush.msra.mxu0 %v2517
          %2541 = vmatmul.f32.gmra.mxu0 %v2523
          %v2542 = vpop.f32.mrf.mxu0
          %v2543 = vadd.f32 %v2521, %v2542
          %2544 = vdwg.mxu0
          %vm2545 = vcmask 57344
          %2546 = vst.msk [vmem:[%s269] sm:$0x1] %vm2545, %v2543
        $region48: #{classifier_forward.1} parent=39 // pred_fallthru
          _
        %s2547 = sand.u32 %s156, 1
        %s2548 = scalar_lea.sflag [#allocation3], %s2547
        %s2549 = sand.u32 %s156, 1
        %s2550 = scalar_lea.vmem [#allocation2], %s2549
        %s2551 = sand.u32 %s182, 1
        %s2552 = scalar_lea.sflag [#allocation5], %s2551
        %s2553 = sand.u32 %s182, 1
        %s2554 = scalar_lea.vmem [#allocation4], %s2553
        // Predicated region
        $region49: #{classifier_forward.1} parent=39 // pred_check
          %p2555 = pneg %p166
        $region50: #{classifier_forward.1} parent=39 // pred_check_branch
          %2557 = sbr.rel (%p2555) target = $region52
        $region51: #{classifier_forward.1} parent=39 // pred_region
          %2559 = vsyncadd %s2548, 0
          %s2560 = scalar_lea.hbm %s5, %s28
          %s2562 = sshll.u32 %s2550, 4
          %s2563 = int_to_ptr.vmem [resolvable:$true] %s2562
          %s2564 = sshll.u32 %s2560, 4
          %s2565 = int_to_ptr.hbm [resolvable:$true] %s2564
          %2567 = dma.vmem_to_hbm [thread:$0]  %s2563, 16, %s2565, %s2548
        $region52: #{classifier_forward.1} parent=39 // pred_fallthru
          _
        // Predicated region
        $region53: #{classifier_forward.1} parent=39 // pred_check
          %p2568 = pneg %p192
        $region54: #{classifier_forward.1} parent=39 // pred_check_branch
          %2570 = sbr.rel (%p2568) target = $region56
        $region55: #{classifier_forward.1} parent=39 // pred_region
          %2572 = vsyncadd %s2552, 0
          %s2573 = scalar_lea.hbm %s6, %s28
          %s2575 = sshll.u32 %s2554, 4
          %s2576 = int_to_ptr.vmem [resolvable:$true] %s2575
          %s2577 = sshll.u32 %s2573, 4
          %s2578 = int_to_ptr.hbm [resolvable:$true] %s2577
          %2580 = dma.vmem_to_hbm [thread:$0]  %s2576, 16, %s2578, %s2552
        $region56: #{classifier_forward.1} parent=39 // pred_fallthru
          _
      $region40: #{classifier_forward.1} parent=5 // pred_fallthru
        _
      %p2581 = scmp.le.s32.totalorder 2, %s19
      // Predicated region
      $region57: #{classifier_forward.1} parent=5 // pred_check
        %p2582 = pneg %p2581
      $region58: #{classifier_forward.1} parent=5 // pred_check_branch
        %2584 = sbr.rel (%p2582) target = $region60
      $region59: #{classifier_forward.1} parent=5 // pred_region
        %s2585 = ssub.s32 %s19, 2
        // Predicated region
        $region61: #{classifier_forward.1} parent=59 // pred_check
          %p2586 = pneg %p172
        $region62: #{classifier_forward.1} parent=59 // pred_check_branch
          %2588 = sbr.rel (%p2586) target = $region64
        $region63: #{classifier_forward.1} parent=59 // pred_region
          %s2589 = sand.u32 %s157, 1
          %s2590 = scalar_lea.sflag [#allocation3], %s2589
          %s2591 = sand.u32 %s157, 1
          %s2592 = scalar_lea.vmem [#allocation2], %s2591
          %2594 = dma.done %s2590, 16
        $region64: #{classifier_forward.1} parent=59 // pred_fallthru
          _
        // Predicated region
        $region65: #{classifier_forward.1} parent=59 // pred_check
          %p2595 = pneg %p198
        $region66: #{classifier_forward.1} parent=59 // pred_check_branch
          %2597 = sbr.rel (%p2595) target = $region68
        $region67: #{classifier_forward.1} parent=59 // pred_region
          %s2598 = sand.u32 %s183, 1
          %s2599 = scalar_lea.sflag [#allocation5], %s2598
          %s2600 = sand.u32 %s183, 1
          %s2601 = scalar_lea.vmem [#allocation4], %s2600
          %2603 = dma.done %s2599, 16
        $region68: #{classifier_forward.1} parent=59 // pred_fallthru
          _
      $region60: #{classifier_forward.1} parent=5 // pred_fallthru
        _
    $region6: #{classifier_forward.1} parent=1 // loop_footer
      %s23 = sadd.s32 1, %s19
    $region7: #{classifier_forward.1} parent=1 // loop_footer_branch
      %18 = sbr.rel target = $region3
    $region8: #{classifier_forward.1} parent=1 // loop_exit
      _
    %2604 = vsyncpa [#allocation3], 1
    %s2605 = scalar_lea.sflag [#allocation3], 1
    %2606 = vsyncpa %s2605, 1
    %2607 = vsyncpa [#allocation5], 1
    %s2608 = scalar_lea.sflag [#allocation5], 1
    %2609 = vsyncpa %s2608, 1

</llo_original>
